<compile_context>
chip_gen: v6e
topology: v6e:2x2x1
jax: 0.10.0
libtpu: 0.0.40
codegen_flags: <defaults>
</compile_context>

<pallas_src>
import functools

import jax
import jax.numpy as jnp
from jax import lax
from jax.experimental import pallas as pl
from jax.experimental.pallas import tpu as pltpu


def _round_up(x: int, m: int) -> int:
    return (x + m - 1) // m * m


# ---------------------------------------------------------------------------
# Kernels
# ---------------------------------------------------------------------------

def _scm_kernel_single(x_ref, o_ref, acc_ref, sum_ref, *,
                       n_samples, ragged_s, assume_centered, precision):
    """Whole (Fp, Fp) Gram matrix resident in VMEM; grid = (B, s)."""
    s = pl.program_id(1)

    @pl.when(s == 0)
    def _init():
        acc_ref[...] = jnp.zeros_like(acc_ref)
        if not assume_centered:
            sum_ref[...] = jnp.zeros_like(sum_ref)

    x = x_ref[...]                                   # (tS, Fp), native dtype
    tS = x.shape[0]
    if ragged_s:
        # Last sample tile may extend past S: the OOB rows of the VMEM buffer
        # are unspecified, so zero them before they touch the MXU.
        row = s * tS + lax.broadcasted_iota(jnp.int32, (tS, 1), 0)
        x = jnp.where(row < n_samples, x, jnp.zeros_like(x))

    # X^T X via a (0, 0)-contraction: no transposed copy of the slab.
    acc_ref[...] += lax.dot_general(
        x, x, dimension_numbers=(((0,), (0,)), ((), ())),
        precision=precision, preferred_element_type=jnp.float32)

    if not assume_centered:
        # Column sums on the MXU: ones(8, tS) @ x -> (8, Fp) with the sum
        # replicated in all 8 rows (so finalize's outer product is a plain
        # (8,Fp)^T(8,Fp) matmul).  No f32 copy of the slab, no VPU tree.
        ones = jnp.ones((8, tS), dtype=x.dtype)
        sum_ref[...] += lax.dot_general(
            ones, x, dimension_numbers=(((1,), (0,)), ((), ())),
            precision=precision, preferred_element_type=jnp.float32)

    @pl.when(s == pl.num_programs(1) - 1)
    def _finalize():
        g = acc_ref[...]
        if assume_centered:
            denom = float(n_samples)
            sigma = g
        else:
            denom = float(n_samples - 1)
            # Rows of sum_ref are 8 identical copies of s -> 8 * s s^T.
            outer = lax.dot_general(
                sum_ref[...], sum_ref[...],
                dimension_numbers=(((0,), (0,)), ((), ())),
                precision=precision, preferred_element_type=jnp.float32)
            # Sigma*(n-1) = G - n*m*m^T  with  m = s / n.
            sigma = g - outer * (1.0 / (8.0 * float(n_samples)))
        # jnp divide so n_samples==1 & not assume_centered gives inf/nan
        # (matching torch) instead of a trace-time error.
        scale = jnp.float32(0.5) / jnp.float32(denom)
        o_ref[...] = (scale * (sigma + sigma.T)).astype(o_ref.dtype)


def _scm_kernel_tiled(xi_ref, xj_ref, o_ref, acc_ref, sum_i_ref, sum_j_ref, *,
                      n_samples, ragged_s, assume_centered, precision):
    """Feature-tiled Gram blocks; grid = (B, i, j, s); symmetrize outside."""
    s = pl.program_id(3)

    @pl.when(s == 0)
    def _init():
        acc_ref[...] = jnp.zeros_like(acc_ref)
        if not assume_centered:
            sum_i_ref[...] = jnp.zeros_like(sum_i_ref)
            sum_j_ref[...] = jnp.zeros_like(sum_j_ref)

    xi = xi_ref[...]                                 # (tS, tF) row block i
    xj = xj_ref[...]                                 # (tS, tF) col block j
    tS = xi.shape[0]
    if ragged_s:
        row = s * tS + lax.broadcasted_iota(jnp.int32, (tS, 1), 0)
        valid = row < n_samples
        xi = jnp.where(valid, xi, jnp.zeros_like(xi))
        xj = jnp.where(valid, xj, jnp.zeros_like(xj))

    acc_ref[...] += lax.dot_general(
        xi, xj, dimension_numbers=(((0,), (0,)), ((), ())),
        precision=precision, preferred_element_type=jnp.float32)

    if not assume_centered:
        ones = jnp.ones((8, tS), dtype=xi.dtype)
        sum_i_ref[...] += lax.dot_general(
            ones, xi, dimension_numbers=(((1,), (0,)), ((), ())),
            precision=precision, preferred_element_type=jnp.float32)
        sum_j_ref[...] += lax.dot_general(
            ones, xj, dimension_numbers=(((1,), (0,)), ((), ())),
            precision=precision, preferred_element_type=jnp.float32)

    @pl.when(s == pl.num_programs(3) - 1)
    def _finalize():
        g = acc_ref[...]
        if assume_centered:
            denom = float(n_samples)
            sigma = g
        else:
            denom = float(n_samples - 1)
            outer = lax.dot_general(
                sum_i_ref[...], sum_j_ref[...],
                dimension_numbers=(((0,), (0,)), ((), ())),
                precision=precision, preferred_element_type=jnp.float32)
            sigma = g - outer * (1.0 / (8.0 * float(n_samples)))
        scale = jnp.float32(1.0) / jnp.float32(denom)   # 0.5*(G+G^T) in wrapper
        o_ref[...] = (scale * sigma).astype(o_ref.dtype)


# ---------------------------------------------------------------------------
# Tile planning
# ---------------------------------------------------------------------------

def _plan_tiles(S, Fp, itemsize, budget, block_s, block_f):
    """Return (tS, tF, single_f_block)."""
    sub = {4: 8, 2: 16, 1: 32}.get(itemsize, 8)

    # Feature tile: single full-width block while the (Fp,Fp) accumulator and
    # output comfortably fit (all generations), otherwise the largest
    # 128-multiple tile whose fixed VMEM footprint fits the budget.
    if block_f is not None:
        tF = min(Fp, _round_up(block_f, 128))
    elif Fp <= 1024:
        tF = Fp
    else:
        tF = 128
        for cand in (1024, 512, 256):
            fixed = cand * cand * (2 * itemsize + 4) + 4 * 256 * cand * itemsize
            if fixed <= int(budget * 0.6):
                tF = cand
                break
    single = tF >= Fp
    if single:
        tF = Fp

    # Sample tile: fill the remaining VMEM budget, rounded to the MXU K
    # granule (256) and capped at 2048 rows.
    n_in = 1 if single else 2
    fixed = tF * tF * (2 * itemsize + 4) + 2 * 8 * tF * 4
    if block_s is not None:
        tS = max(sub, _round_up(block_s, sub))
    else:
        avail = max(budget - fixed, 1 << 20)
        tS = avail // (2 * n_in * tF * itemsize)
        tS = max(256, min(2048, (tS // 256) * 256))
    tS = min(tS, max(sub, _round_up(S, sub)))
    tS = _round_up(tS, sub)
    return tS, tF, single


# ---------------------------------------------------------------------------
# Public wrapper
# ---------------------------------------------------------------------------

def scm(X: jax.Array, assume_centered: bool = True, *,
        block_s: int | None = None, block_f: int | None = None,
        precision=None) -> jax.Array:
    """SCM covariance estimate: X (..., S, F) -> (..., F, F)."""
    *batch_dims, S, F = X.shape
    B = 1
    for d in batch_dims:
        B *= d

    dtype = X.dtype
    itemsize = jnp.dtype(dtype).itemsize
    if precision is None and dtype == jnp.float32:
        # Parity with a float32 torch module by default; callers on v5e can
        # pass lax.Precision.DEFAULT (or cast to bf16) for ~6x MXU savings.
        precision = lax.Precision.HIGHEST

    Fp = _round_up(F, 128)                       # lane-dense MXU operands

    # Generation-aware VMEM budget (64 MiB/TC on v7x, 128 MiB on v5e/v6e).
    try:
        vmem_cap = int(pltpu.get_tpu_info().vmem_capacity_bytes)
        if vmem_cap < (16 << 20):
            vmem_cap = 64 << 20
    except Exception:                            # pragma: no cover
        vmem_cap = 64 << 20
    budget = int(vmem_cap * 0.5)

    tS, tF, single = _plan_tiles(S, Fp, itemsize, budget, block_s, block_f)
    n_s = pl.cdiv(S, tS)
    ragged_s = (S % tS) != 0                     # last sample tile masked in-kernel

    Xf = X.reshape(B, S, F)
    if Fp != F:
        # Only the feature axis is zero-padded (exact: zero features add
        # nothing to the Gram matrix or the column sums).  The sample axis is
        # never padded, so no HBM copy of X when F is already 128-aligned.
        Xf = jnp.pad(Xf, ((0, 0), (0, 0), (0, Fp - F)))

    common = dict(n_samples=S, ragged_s=ragged_s,
                  assume_centered=assume_centered, precision=precision)

    if single:
        kernel = functools.partial(_scm_kernel_single, **common)
        grid = (B, n_s)
        in_specs = [pl.BlockSpec((pl.Squeezed(), tS, Fp),
                                 lambda b, s: (b, s, 0))]
        out_specs = pl.BlockSpec((pl.Squeezed(), Fp, Fp),
                                 lambda b, s: (b, 0, 0))
        scratch = [pltpu.VMEM((Fp, Fp), jnp.float32),    # Gram accumulator
                   pltpu.VMEM((8, Fp), jnp.float32)]     # column sums
        dims = ("parallel", "arbitrary")
        operands = (Xf,)
        steps = B * n_s
        in_bytes_per_step = tS * Fp * itemsize
    else:
        n_f = pl.cdiv(Fp, tF)
        kernel = functools.partial(_scm_kernel_tiled, **common)
        grid = (B, n_f, n_f, n_s)                # s innermost (reduction)
        in_specs = [pl.BlockSpec((pl.Squeezed(), tS, tF),
                                 lambda b, i, j, s: (b, s, i)),
                    pl.BlockSpec((pl.Squeezed(), tS, tF),
                                 lambda b, i, j, s: (b, s, j))]
        out_specs = pl.BlockSpec((pl.Squeezed(), tF, tF),
                                 lambda b, i, j, s: (b, i, j))
        scratch = [pltpu.VMEM((tF, tF), jnp.float32),
                   pltpu.VMEM((8, tF), jnp.float32),
                   pltpu.VMEM((8, tF), jnp.float32)]
        # i/j parallel -> both v7x TensorCores busy even at B == 1.
        dims = ("parallel", "parallel", "parallel", "arbitrary")
        operands = (Xf, Xf)
        steps = B * n_f * n_f * n_s
        in_bytes_per_step = 2 * tS * tF * itemsize

    n_in = len(operands)
    vmem_need = (n_in * 2 * tS * tF * itemsize       # double-buffered inputs
                 + 2 * tF * tF * itemsize            # double-buffered output
                 + tF * tF * 4                       # f32 accumulator
                 + n_in * 8 * tF * 4)                # column sums
    vmem_limit = max(16 << 20,
                     min(int(vmem_need * 1.3) + (4 << 20),
                         int(vmem_cap * 0.8)))

    cost = pl.CostEstimate(
        flops=int(2 * steps * tS * tF * tF),
        transcendentals=0,
        bytes_accessed=int(steps * in_bytes_per_step + B * Fp * Fp * itemsize),
    )

    out = pl.pallas_call(
        kernel,
        out_shape=jax.ShapeDtypeStruct((B, Fp, Fp), dtype),
        grid_spec=pltpu.PrefetchScalarGridSpec(
            num_scalar_prefetch=0, grid=grid,
            in_specs=in_specs, out_specs=out_specs, scratch_shapes=scratch),
        compiler_params=pltpu.CompilerParams(
            dimension_semantics=dims, vmem_limit_bytes=int(vmem_limit)),
        cost_estimate=cost,
    )(*operands)

    if not single:
        # Each block only holds G_ij; symmetrize across blocks here (one cheap
        # F^2 elementwise pass vs. S*F of input traffic).
        out = 0.5 * (out + jnp.swapaxes(out, -1, -2))

    out = out[:, :F, :F]
    return out.reshape(*batch_dims, F, F)


# ---------------------------------------------------------------------------
# Reference + tests
# ---------------------------------------------------------------------------

def _scm_ref(X, assume_centered=True):
    if assume_centered:
        Xc = X
        n = X.shape[-2]
    else:
        Xc = X - X.mean(axis=-2, keepdims=True)
        n = X.shape[-2] - 1
    Sigma = jnp.einsum("...ji,...jk->...ik", Xc, Xc,
                       precision=lax.Precision.HIGHEST) / n
    return 0.5 * (Sigma + jnp.swapaxes(Sigma, -2, -1))


if __name__ == "__main__":
    key = jax.random.PRNGKey(0)
    k1, k2, k3 = jax.random.split(key, 3)

    # 1) Small single-block case: batch=2, n_samples=16, n_features=8.
    X = jax.random.normal(k1, (2, 16, 8), dtype=jnp.float32)
    out = jax.block_until_ready(scm(X, assume_centered=True))
    assert out.shape == (2, 8, 8)
    assert jnp.allclose(out, _scm_ref(X, True), atol=1e-4, rtol=1e-4)
    out2 = jax.block_until_ready(scm(X, assume_centered=False))
    assert jnp.allclose(out2, _scm_ref(X, False), atol=1e-4, rtol=1e-4)

    # 2) Multi batch dims + ragged sample tiles (S=40, block_s=16 -> 3 tiles,
    #    last one masked in-kernel, no HBM pad of the sample axis), nonzero
    #    mean for the centering path.
    X2 = jax.random.normal(k2, (2, 3, 40, 20), dtype=jnp.float32) + 0.5
    out3 = jax.block_until_ready(scm(X2, assume_centered=False, block_s=16))
    assert out3.shape == (2, 3, 20, 20)
    assert jnp.allclose(out3, _scm_ref(X2, False), atol=1e-4, rtol=1e-4)
    out4 = jax.block_until_ready(scm(X2, assume_centered=True, block_s=16))
    assert jnp.allclose(out4, _scm_ref(X2, True), atol=1e-4, rtol=1e-4)

    # 3) Feature-tiled path (forced small so the test stays quick): B=1,
    #    S=40 (ragged sample tiles), F=300 -> Fp=384, block_f=256 -> 2x2
    #    ragged feature blocks; symmetrization happens in the wrapper.
    X3 = jax.random.normal(k3, (1, 40, 300), dtype=jnp.float32) + 0.25
    out5 = jax.block_until_ready(
        scm(X3, assume_centered=False, block_s=16, block_f=256))
    assert out5.shape == (1, 300, 300)
    assert jnp.allclose(out5, _scm_ref(X3, False), atol=1e-4, rtol=1e-4)
    out6 = jax.block_until_ready(
        scm(X3, assume_centered=True, block_s=16, block_f=256))
    assert jnp.allclose(out6, _scm_ref(X3, True), atol=1e-4, rtol=1e-4)

    # 4) bf16 inputs feed the MXU natively (f32 accumulation); loose tolerance
    #    only accounts for the final cast of the output back to bf16.
    Xb = X.astype(jnp.bfloat16)
    outb = jax.block_until_ready(scm(Xb, assume_centered=True))
    refb = _scm_ref(Xb.astype(jnp.float32), True)
    assert jnp.allclose(outb.astype(jnp.float32), refb, atol=3e-2, rtol=3e-2)

    print("KERNEL_OK")
</pallas_src>

<mosaic_0001>
module attributes {stable_mosaic.version = 11 : i64} {
  func.func @_scm_kernel_single(%arg0: i32, %arg1: i32, %arg2: memref<1x16x128xf32, #tpu.memory_space<vmem>>, %arg3: memref<1x128x128xf32, #tpu.memory_space<vmem>>, %arg4: memref<128x128xf32, #tpu.memory_space<vmem>>, %arg5: memref<8x128xf32, #tpu.memory_space<vmem>>) attributes {dimension_semantics = [#tpu.dimension_semantics<parallel>, #tpu.dimension_semantics<arbitrary>], iteration_bounds = array<i64: 2, 1>, scalar_prefetch = 0 : i64, scratch_operands = 2 : i64, tpu.core_type = #tpu.core_type<tc>, window_params = [{transform_indices = @transform_0, window_bounds = array<i64: 1, 16, 128>}, {transform_indices = @transform_1, window_bounds = array<i64: 1, 128, 128>}]} {
    %c0_i32 = arith.constant 0 : i32
    %0 = arith.cmpi eq, %arg1, %c0_i32 : i32
    %1 = arith.extui %0 : i1 to i32
    %c0_i32_0 = arith.constant 0 : i32
    %2 = arith.cmpi ne, %1, %c0_i32_0 : i32
    scf.if %2 {
      %cst_9 = arith.constant 0.000000e+00 : f32
      %12 = vector.broadcast %cst_9 : f32 to vector<128x128xf32>
      %c0_10 = arith.constant 0 : index
      %c0_11 = arith.constant 0 : index
      %13 = vector.load %arg4[%c0_10, %c0_11] : memref<128x128xf32, #tpu.memory_space<vmem>>, vector<128x128xf32>
      tpu.vector_store %arg4[%c0_10, %c0_11], %12 {strides = array<i32>} : memref<128x128xf32, #tpu.memory_space<vmem>>, vector<128x128xf32>,
    } else {
    }
    %c0 = arith.constant 0 : index
    %c0_1 = arith.constant 0 : index
    %c0_2 = arith.constant 0 : index
    %3 = vector.load %arg2[%c0, %c0_1, %c0_2] : memref<1x16x128xf32, #tpu.memory_space<vmem>>, vector<1x16x128xf32>
    %4 = vector.shape_cast %3 : vector<1x16x128xf32> to vector<16x128xf32>
    %c0_3 = arith.constant 0 : index
    %c0_4 = arith.constant 0 : index
    %5 = vector.load %arg4[%c0_3, %c0_4] : memref<128x128xf32, #tpu.memory_space<vmem>>, vector<128x128xf32>
    %cst = arith.constant dense<0.000000e+00> : vector<128x128xf32>
    %6 = tpu.matmul %4, %4, %cst {dimension_numbers = #tpu.dot_dimension_numbers<[0], [0], [1], [1], [0, 1, 1, 1], [], []>, precision = #tpu.contract_precision<fp32>} : vector<16x128xf32>, vector<16x128xf32>, vector<128x128xf32> -> vector<128x128xf32>
    %7 = arith.addf %5, %6 : vector<128x128xf32>
    %c0_5 = arith.constant 0 : index
    %c0_6 = arith.constant 0 : index
    %8 = vector.load %arg4[%c0_5, %c0_6] : memref<128x128xf32, #tpu.memory_space<vmem>>, vector<128x128xf32>
    tpu.vector_store %arg4[%c0_5, %c0_6], %7 {strides = array<i32>} : memref<128x128xf32, #tpu.memory_space<vmem>>, vector<128x128xf32>,
    %c0_i32_7 = arith.constant 0 : i32
    %9 = arith.cmpi eq, %arg1, %c0_i32_7 : i32
    %10 = arith.extui %9 : i1 to i32
    %c0_i32_8 = arith.constant 0 : i32
    %11 = arith.cmpi ne, %10, %c0_i32_8 : i32
    scf.if %11 {
      %c0_9 = arith.constant 0 : index
      %c0_10 = arith.constant 0 : index
      %12 = vector.load %arg4[%c0_9, %c0_10] : memref<128x128xf32, #tpu.memory_space<vmem>>, vector<128x128xf32>
      %cst_11 = arith.constant 5.000000e-01 : f32
      %cst_12 = arith.constant 1.600000e+01 : f32
      %13 = arith.divf %cst_11, %cst_12 : f32
      %14 = tpu.transpose %12, [1, 0] : vector<128x128xf32> -> vector<128x128xf32>
      %15 = arith.addf %12, %14 : vector<128x128xf32>
      %16 = vector.broadcast %13 : f32 to vector<128x128xf32>
      %17 = arith.mulf %16, %15 : vector<128x128xf32>
      %c0_13 = arith.constant 0 : index
      %c0_14 = arith.constant 0 : index
      %c0_15 = arith.constant 0 : index
      %18 = vector.load %arg3[%c0_13, %c0_14, %c0_15] : memref<1x128x128xf32, #tpu.memory_space<vmem>>, vector<1x128x128xf32>
      %19 = vector.shape_cast %18 : vector<1x128x128xf32> to vector<128x128xf32>
      %20 = vector.shape_cast %17 : vector<128x128xf32> to vector<1x128x128xf32>
      tpu.vector_store %arg3[%c0_13, %c0_14, %c0_15], %20 {strides = array<i32>} : memref<1x128x128xf32, #tpu.memory_space<vmem>>, vector<1x128x128xf32>,
    } else {
    }
    return
  }
  func.func @transform_0(%arg0: i32, %arg1: i32) -> (i32, i32, i32) {
    %c0_i32 = arith.constant 0 : i32
    %c0_i32_0 = arith.constant 0 : i32
    return %arg0, %arg1, %c0_i32 : i32, i32, i32
  }
  func.func @transform_1(%arg0: i32, %arg1: i32) -> (i32, i32, i32) {
    %c0_i32 = arith.constant 0 : i32
    %c0_i32_0 = arith.constant 0 : i32
    %c0_i32_1 = arith.constant 0 : i32
    return %arg0, %c0_i32, %c0_i32_0 : i32, i32, i32
  }
}

</mosaic_0001>

<llo_original>
// kernel: tpu_custom_call.1
$region0: #{tpu_custom_call.1}
  #allocation0 [shape = 'u32[]', space=smem, size = 0x4, offset = 0x4, fixed_abs, tag = 'smem constant byte address 0x4 - core index']
  #allocation1 [shape = 'u32[144,128]{1,0:T(1,128)}', space=vmem, size = 0x12000, scoped, tag = 'internal scratch']
  #allocation2 [shape = 'f32[128,128]{1,0:T(8,128)}', space=vmem, size = 0x10000, scoped, tag = 'scratch operand']
  #allocation3 [shape = 'f32[8,128]{1,0:T(8,128)}', space=vmem, size = 0x1000, scoped, tag = 'scratch operand']
  %s0 = inlined_call_operand.hbm [shape: f32[2,16,128], index: 0, kind: input, shape index: {}]
  %s1 = inlined_call_operand.hbm [shape: f32[2,128,128], index: 1, kind: output, shape index: {}]
  %s2 = sld [smem:[#allocation0]]
  $region49: #{tpu_custom_call.1} parent=0
    _
  %s4 = ssub.s32 1, %s2
  %s5 = scalar_select 0, %s4, %s2
  $region1: #{tpu_custom_call.1} parent=0
    #allocation4 [shape = 'u8[16384]{0}', space=vmem, size = 0x4000, scoped, tag = 'input window, operand 0']
    #allocation5 [shape = 's32[2]{0}', space=sflag, size = 0x8, scoped, tag = 'scoped memory for tpu_custom_call.1']
    #allocation6 [shape = 's32[2]{0}', space=sflag, size = 0x8, scoped, tag = 'scoped memory for tpu_custom_call.1']
    #allocation7 [shape = 'u8[131072]{0}', space=vmem, size = 0x20000, scoped, tag = 'output window, operand 0']
    %6 = vsyncpa [#allocation5], 0
    %s7 = scalar_lea.sflag [#allocation5], 1
    %8 = vsyncpa %s7, 0
    %9 = vsyncpa [#allocation6], 0
    %s10 = scalar_lea.sflag [#allocation6], 1
    %11 = vsyncpa %s10, 0
    loop: start=0, step=1, limit=4
    $region2: #{tpu_custom_call.1} parent=1 // loop_pre_header
      _
    $region3: #{tpu_custom_call.1} parent=1 // loop_header
      %s13 = sphi 0, %s17
      %p14 = scmp.ge.s32.totalorder %s13, 4
      %s20 = sphi 0, %s32
      %s21 = sphi 0, %s28
      %s22 = sphi 0, %s20
      %s23 = sphi 0, %s21
      %s24 = sphi 0, %s22
      %s25 = sphi 0, %s23
      %s37 = sphi 0, %s39
      %s40 = sphi 0, %s37
      %s41 = sphi 0, %s40
      %s57 = sphi 0, %s41
      %s63 = sphi 0, %s65
      %s66 = sphi 0, %s63
      %s67 = sphi 0, %s66
      %s83 = sphi 0, %s67
    $region4: #{tpu_custom_call.1} parent=1 // loop_header_branch
      %16 = sbr.rel (%p14) target = $region8
    $region5: #{tpu_custom_call.1} parent=1 // loop_body
      %s18 = ssub.s32 %s13, 1
      %s19 = ssub.s32 %s13, 2
      %s26 = sadd.s32 1, %s21
      %p27 = scmp.ge.s32.totalorder %s26, 1
      %s28 = scalar_select %p27, 0, %s26
      %s29 = sadd.s32 1, %s20
      %s30 = scalar_select %p27, %s29, %s20
      %p31 = scmp.ge.s32.totalorder %s30, 2
      %s32 = scalar_select %p31, 0, %s30
      %s33 = ssub.s32 %s20, %s32
      %s34 = ssub.s32 %s21, %s28
      %s35 = sor.u32 %s33, %s34
      %p36 = scmp.eq.s32.totalorder %s35, 0
      %s38 = sadd.s32 %s37, 1
      %s39 = scalar_select %p36, %s37, %s38
      %p42 = pneg %p36
      %p43 = scmp.eq.s32.totalorder %s13, 1
      %p44 = por %p42, %p43
      %p45 = scmp.ne.s32.totalorder %s37, %s40
      %p46 = scmp.eq.s32.totalorder %s13, 0
      %p47 = por %p45, %p46
      %p48 = scmp.ne.s32.totalorder %s37, %s40
      %p49 = scmp.eq.s32.totalorder %s18, 1
      %p50 = por %p48, %p49
      %p51 = scmp.ne.s32.totalorder %s40, %s41
      %p52 = scmp.eq.s32.totalorder %s18, 0
      %p53 = por %p51, %p52
      %p54 = scmp.ne.s32.totalorder %s40, %s41
      %p55 = scmp.eq.s32.totalorder %s19, 1
      %p56 = por %p54, %p55
      %p58 = scmp.ne.s32.totalorder %s41, %s57
      %p59 = scmp.eq.s32.totalorder %s19, 0
      %p60 = por %p58, %p59
      %s61 = ssub.s32 %s20, %s32
      %p62 = scmp.eq.s32.totalorder %s61, 0
      %s64 = sadd.s32 %s63, 1
      %s65 = scalar_select %p62, %s63, %s64
      %p68 = pneg %p62
      %p69 = scmp.eq.s32.totalorder %s13, 1
      %p70 = por %p68, %p69
      %p71 = scmp.ne.s32.totalorder %s63, %s66
      %p72 = scmp.eq.s32.totalorder %s13, 0
      %p73 = por %p71, %p72
      %p74 = scmp.ne.s32.totalorder %s63, %s66
      %p75 = scmp.eq.s32.totalorder %s18, 1
      %p76 = por %p74, %p75
      %p77 = scmp.ne.s32.totalorder %s66, %s67
      %p78 = scmp.eq.s32.totalorder %s18, 0
      %p79 = por %p77, %p78
      %p80 = scmp.ne.s32.totalorder %s66, %s67
      %p81 = scmp.eq.s32.totalorder %s19, 1
      %p82 = por %p80, %p81
      %p84 = scmp.ne.s32.totalorder %s67, %s83
      %p85 = scmp.eq.s32.totalorder %s19, 0
      %p86 = por %p84, %p85
      %p87 = scmp.le.s32.totalorder 1, %s13
      %p88 = scmp.lt.s32.totalorder %s13, 3
      %p89 = pnand %p87, %p88
      %p90 = pneg %p89
      // Predicated region
      $region9: #{tpu_custom_call.1} parent=5 // pred_check
        _
      $region10: #{tpu_custom_call.1} parent=5 // pred_check_branch
        %92 = sbr.rel (%p89) target = $region12
      $region11: #{tpu_custom_call.1} parent=5 // pred_region
        %s93 = ssub.s32 %s13, 1
      $region12: #{tpu_custom_call.1} parent=5 // pred_fallthru
        _
      %p94 = scmp.lt.s32.totalorder %s13, 2
      // Predicated region
      $region13: #{tpu_custom_call.1} parent=5 // pred_check
        %p95 = pneg %p94
      $region14: #{tpu_custom_call.1} parent=5 // pred_check_branch
        %97 = sbr.rel (%p95) target = $region16
      $region15: #{tpu_custom_call.1} parent=5 // pred_region
        // Predicated region
        $region17: #{tpu_custom_call.1} parent=15 // pred_check
          %p98 = pneg %p47
        $region18: #{tpu_custom_call.1} parent=15 // pred_check_branch
          %100 = sbr.rel (%p98) target = $region20
        $region19: #{tpu_custom_call.1} parent=15 // pred_region
          %s101 = sand.u32 %s37, 1
          %s102 = scalar_lea.sflag [#allocation5], %s101
          %s103 = sand.u32 %s37, 1
          %s104 = smul.addr %s103, 16
          %s105 = scalar_lea.vmem [#allocation4], %s104
          %s106 = smul.u32 2, %s21
          %s108 = ssub.s32 256, 256
          %109 = vsyncadd %s102, %s108
          %s110 = smul.addr %s20, 2
          %s111 = sadd.s32 %s106, %s110
          %s112 = smul.addr %s111, 128
          %s113 = scalar_lea.hbm %s0, %s112
          %s114 = sshll.u32 %s105, 4
          %s115 = int_to_ptr.vmem [resolvable:$true] %s114
          %120 = dma.hbm_to_vmem [thread:$0]  %s113, 256, %s115, %s102, 128, 128, 8
        $region20: #{tpu_custom_call.1} parent=15 // pred_fallthru
          _
      $region16: #{tpu_custom_call.1} parent=5 // pred_fallthru
        _
      %p121 = scmp.le.s32.totalorder 1, %s13
      %p122 = scmp.lt.s32.totalorder %s13, 3
      %p123 = pnand %p121, %p122
      %p124 = pneg %p123
      // Predicated region
      $region21: #{tpu_custom_call.1} parent=5 // pred_check
        _
      $region22: #{tpu_custom_call.1} parent=5 // pred_check_branch
        %126 = sbr.rel (%p123) target = $region24
      $region23: #{tpu_custom_call.1} parent=5 // pred_region
        %s127 = ssub.s32 %s13, 1
        %s128 = sand.u32 %s40, 1
        %s129 = scalar_lea.sflag [#allocation5], %s128
        %s130 = sand.u32 %s40, 1
        %s131 = smul.addr %s130, 16
        %s132 = scalar_lea.vmem [#allocation4], %s131
        // Predicated region
        $region25: #{tpu_custom_call.1} parent=23 // pred_check
          %p133 = pneg %p53
        $region26: #{tpu_custom_call.1} parent=23 // pred_check_branch
          %135 = sbr.rel (%p133) target = $region28
        $region27: #{tpu_custom_call.1} parent=23 // pred_region
          %136 = dma.done %s129, 256
        $region28: #{tpu_custom_call.1} parent=23 // pred_fallthru
          _
        %s137 = sand.u32 %s40, 1
        %s138 = scalar_lea.sflag [#allocation5], %s137
        %s139 = sand.u32 %s40, 1
        %s140 = smul.addr %s139, 16
        %s141 = scalar_lea.vmem [#allocation4], %s140
        %p142 = pneg %p53
        %p143 = pneg %p50
        %p144 = pneg %p79
        %p145 = pneg %p76
        %s146 = sand.u32 %s66, 1
        %s147 = scalar_lea.sflag [#allocation6], %s146
        %s148 = sand.u32 %s66, 1
        %s149 = smul.addr %s148, 128
        %s150 = scalar_lea.vmem [#allocation7], %s149
        %s151 = smul.u32 2, %s23
        %p152 = scmp.eq.s32.totalorder %s23, 0
        // Predicated region
        $region29: #{tpu_custom_call.1} parent=23 // pred_check
          %p153 = pneg %p152
        $region30: #{tpu_custom_call.1} parent=23 // pred_check_branch
          %155 = sbr.rel (%p153) target = $region32
        $region31: #{tpu_custom_call.1} parent=23 // pred_region
          %156 = vst [vmem:[#allocation2] sm:$0xff] 0.0
          %157 = vst [vmem:[#allocation2 + $0x8] sm:$0xff] 0.0
          %158 = vst [vmem:[#allocation2 + $0x10] sm:$0xff] 0.0
          %159 = vst [vmem:[#allocation2 + $0x18] sm:$0xff] 0.0
          %160 = vst [vmem:[#allocation2 + $0x20] sm:$0xff] 0.0
          %161 = vst [vmem:[#allocation2 + $0x28] sm:$0xff] 0.0
          %162 = vst [vmem:[#allocation2 + $0x30] sm:$0xff] 0.0
          %163 = vst [vmem:[#allocation2 + $0x38] sm:$0xff] 0.0
          %164 = vst [vmem:[#allocation2 + $0x40] sm:$0xff] 0.0
          %165 = vst [vmem:[#allocation2 + $0x48] sm:$0xff] 0.0
          %166 = vst [vmem:[#allocation2 + $0x50] sm:$0xff] 0.0
          %167 = vst [vmem:[#allocation2 + $0x58] sm:$0xff] 0.0
          %168 = vst [vmem:[#allocation2 + $0x60] sm:$0xff] 0.0
          %169 = vst [vmem:[#allocation2 + $0x68] sm:$0xff] 0.0
          %170 = vst [vmem:[#allocation2 + $0x70] sm:$0xff] 0.0
          %171 = vst [vmem:[#allocation2 + $0x78] sm:$0xff] 0.0
        $region32: #{tpu_custom_call.1} parent=23 // pred_fallthru
          _
        %v172 = vld [vmem:[%s132] sm:$0xff]
        %v173 = vld [vmem:[%s132 + $0x8] sm:$0xff]
        %v174 = vld [vmem:[#allocation2] sm:$0xff]
        %v175 = vld [vmem:[#allocation2 + $0x8] sm:$0xff]
        %v176 = vld [vmem:[#allocation2 + $0x10] sm:$0xff]
        %v177 = vld [vmem:[#allocation2 + $0x18] sm:$0xff]
        %v178 = vld [vmem:[#allocation2 + $0x20] sm:$0xff]
        %v179 = vld [vmem:[#allocation2 + $0x28] sm:$0xff]
        %v180 = vld [vmem:[#allocation2 + $0x30] sm:$0xff]
        %v181 = vld [vmem:[#allocation2 + $0x38] sm:$0xff]
        %v182 = vld [vmem:[#allocation2 + $0x40] sm:$0xff]
        %v183 = vld [vmem:[#allocation2 + $0x48] sm:$0xff]
        %v184 = vld [vmem:[#allocation2 + $0x50] sm:$0xff]
        %v185 = vld [vmem:[#allocation2 + $0x58] sm:$0xff]
        %v186 = vld [vmem:[#allocation2 + $0x60] sm:$0xff]
        %v187 = vld [vmem:[#allocation2 + $0x68] sm:$0xff]
        %v188 = vld [vmem:[#allocation2 + $0x70] sm:$0xff]
        %v189 = vld [vmem:[#allocation2 + $0x78] sm:$0xff]
        %190 = vxpose.xlu0.b32.start [1/16] %v172, 128
        %191 = vxpose.xlu0.b32.cont [2/16] %v173, 128
        %192 = vxpose.xlu0.b32.cont [3/16] 0.0, 128
        %193 = vxpose.xlu0.b32.cont [4/16] 0.0, 128
        %194 = vxpose.xlu0.b32.cont [5/16] 0.0, 128
        %195 = vxpose.xlu0.b32.cont [6/16] 0.0, 128
        %196 = vxpose.xlu0.b32.cont [7/16] 0.0, 128
        %197 = vxpose.xlu0.b32.cont [8/16] 0.0, 128
        %198 = vxpose.xlu0.b32.cont [9/16] 0.0, 128
        %199 = vxpose.xlu0.b32.cont [10/16] 0.0, 128
        %200 = vxpose.xlu0.b32.cont [11/16] 0.0, 128
        %201 = vxpose.xlu0.b32.cont [12/16] 0.0, 128
        %202 = vxpose.xlu0.b32.cont [13/16] 0.0, 128
        %203 = vxpose.xlu0.b32.cont [14/16] 0.0, 128
        %204 = vxpose.xlu0.b32.cont [15/16] 0.0, 128
        %205 = vxpose.xlu0.b32.end [16/16] 0.0, 128
        %v206 = vpop.trf.xlu0
        %v207 = vpop.trf.xlu0
        %v208 = vpop.trf.xlu0
        %v209 = vpop.trf.xlu0
        %v210 = vpop.trf.xlu0
        %v211 = vpop.trf.xlu0
        %v212 = vpop.trf.xlu0
        %v213 = vpop.trf.xlu0
        %v214 = vpop.trf.xlu0
        %v215 = vpop.trf.xlu0
        %v216 = vpop.trf.xlu0
        %v217 = vpop.trf.xlu0
        %v218 = vpop.trf.xlu0
        %v219 = vpop.trf.xlu0
        %v220 = vpop.trf.xlu0
        %v221 = vpop.trf.xlu0
        %vm222 = vcmask 130048
        %v224 = vsel %vm222, %v206, 0
        %v227 = vsel %vm222, %v207, 0
        %v230 = vsel %vm222, %v208, 0
        %v233 = vsel %vm222, %v209, 0
        %v236 = vsel %vm222, %v210, 0
        %v239 = vsel %vm222, %v211, 0
        %v242 = vsel %vm222, %v212, 0
        %v245 = vsel %vm222, %v213, 0
        %v248 = vsel %vm222, %v214, 0
        %v251 = vsel %vm222, %v215, 0
        %v254 = vsel %vm222, %v216, 0
        %v257 = vsel %vm222, %v217, 0
        %v260 = vsel %vm222, %v218, 0
        %v263 = vsel %vm222, %v219, 0
        %v266 = vsel %vm222, %v220, 0
        %v269 = vsel %vm222, %v221, 0
        %271 = vmatprep.subr.mxu0 0.0
        %272 = vmatpush1.msra.mxu0 0.0
        %273 = vmatprep.subr.mxu0 0.0
        %274 = vmatpush1.msra.mxu0 0.0
        %275 = vmatprep.subr.mxu0 0.0
        %276 = vmatpush1.msra.mxu0 0.0
        %277 = vmatprep.subr.mxu0 0.0
        %278 = vmatpush1.msra.mxu0 0.0
        %279 = vmatprep.subr.mxu0 0.0
        %280 = vmatpush1.msra.mxu0 0.0
        %281 = vmatprep.subr.mxu0 0.0
        %282 = vmatpush1.msra.mxu0 0.0
        %283 = vmatprep.subr.mxu0 0.0
        %284 = vmatpush1.msra.mxu0 0.0
        %285 = vmatprep.subr.mxu0 0.0
        %286 = vmatpush1.msra.mxu0 0.0
        %287 = vmatprep.subr.mxu0 0.0
        %288 = vmatpush1.msra.mxu0 0.0
        %289 = vmatprep.subr.mxu0 0.0
        %290 = vmatpush1.msra.mxu0 0.0
        %291 = vmatprep.subr.mxu0 0.0
        %292 = vmatpush1.msra.mxu0 0.0
        %293 = vmatprep.subr.mxu0 0.0
        %294 = vmatpush1.msra.mxu0 0.0
        %295 = vmatprep.subr.mxu0 0.0
        %296 = vmatpush1.msra.mxu0 0.0
        %297 = vmatprep.subr.mxu0 0.0
        %298 = vmatpush1.msra.mxu0 0.0
        %299 = vmatprep.subr.mxu0 0.0
        %v300 = vand.u32 %v173, 4294901760
        %301 = vmatpush1.msra.mxu0 %v300
        %302 = vmatprep.subr.mxu0 0.0
        %v303 = vand.u32 %v172, 4294901760
        %304 = vmatpush1.msra.mxu0 %v303
        %305 = vmatprep.subr.mxu0 0.0
        %306 = vmatpush2.msra.mxu0 0.0
        %307 = vmatprep.subr.mxu0 0.0
        %308 = vmatpush2.msra.mxu0 0.0
        %309 = vmatprep.subr.mxu0 0.0
        %310 = vmatpush2.msra.mxu0 0.0
        %311 = vmatprep.subr.mxu0 0.0
        %312 = vmatpush2.msra.mxu0 0.0
        %313 = vmatprep.subr.mxu0 0.0
        %314 = vmatpush2.msra.mxu0 0.0
        %315 = vmatprep.subr.mxu0 0.0
        %316 = vmatpush2.msra.mxu0 0.0
        %317 = vmatprep.subr.mxu0 0.0
        %318 = vmatpush2.msra.mxu0 0.0
        %319 = vmatprep.subr.mxu0 0.0
        %320 = vmatpush2.msra.mxu0 0.0
        %321 = vmatprep.subr.mxu0 0.0
        %322 = vmatpush2.msra.mxu0 0.0
        %323 = vmatprep.subr.mxu0 0.0
        %324 = vmatpush2.msra.mxu0 0.0
        %325 = vmatprep.subr.mxu0 0.0
        %326 = vmatpush2.msra.mxu0 0.0
        %327 = vmatprep.subr.mxu0 0.0
        %328 = vmatpush2.msra.mxu0 0.0
        %329 = vmatprep.subr.mxu0 0.0
        %330 = vmatpush2.msra.mxu0 0.0
        %331 = vmatprep.subr.mxu0 0.0
        %332 = vmatpush2.msra.mxu0 0.0
        %333 = vmatprep.subr.mxu0 0.0
        %334 = vmatpush2.msra.mxu0 0.0
        %335 = vmatprep.subr.mxu0 0.0
        %336 = vmatpush2.msra.mxu0 0.0
        %337 = vmatprep.mubr.f32.mxu0 0.0
        %v338 = vand.u32 %v224, 4294901760
        %v339 = vsub.f32 %v224, %v338
        %v340 = vand.u32 %v339, 4294901760
        %v341 = vsub.f32 %v339, %v340
        %v342 = vand.u32 %v341, 4294901760
        %343 = vmatmul.mubr.f32.gmra.mxu0 %v342
        %v344 = vpop.f32.mrf.mxu0
        %v345 = vadd.f32 0.0, %v344
        %v346 = vpop.f32.mrf.mxu0
        %347 = vmatprep.mubr.f32.mxu0 0.0
        %v348 = vand.u32 %v227, 4294901760
        %v349 = vsub.f32 %v227, %v348
        %v350 = vand.u32 %v349, 4294901760
        %v351 = vsub.f32 %v349, %v350
        %v352 = vand.u32 %v351, 4294901760
        %353 = vmatmul.mubr.f32.gmra.mxu0 %v352
        %v354 = vpop.f32.mrf.mxu0
        %v355 = vadd.f32 0.0, %v354
        %v356 = vpop.f32.mrf.mxu0
        %357 = vmatprep.mubr.f32.mxu0 0.0
        %v358 = vand.u32 %v230, 4294901760
        %v359 = vsub.f32 %v230, %v358
        %v360 = vand.u32 %v359, 4294901760
        %v361 = vsub.f32 %v359, %v360
        %v362 = vand.u32 %v361, 4294901760
        %363 = vmatmul.mubr.f32.gmra.mxu0 %v362
        %v364 = vpop.f32.mrf.mxu0
        %v365 = vadd.f32 0.0, %v364
        %v366 = vpop.f32.mrf.mxu0
        %367 = vmatprep.mubr.f32.mxu0 0.0
        %v368 = vand.u32 %v233, 4294901760
        %v369 = vsub.f32 %v233, %v368
        %v370 = vand.u32 %v369, 4294901760
        %v371 = vsub.f32 %v369, %v370
        %v372 = vand.u32 %v371, 4294901760
        %373 = vmatmul.mubr.f32.gmra.mxu0 %v372
        %v374 = vpop.f32.mrf.mxu0
        %v375 = vadd.f32 0.0, %v374
        %v376 = vpop.f32.mrf.mxu0
        %377 = vmatprep.mubr.f32.mxu0 0.0
        %v378 = vand.u32 %v236, 4294901760
        %v379 = vsub.f32 %v236, %v378
        %v380 = vand.u32 %v379, 4294901760
        %v381 = vsub.f32 %v379, %v380
        %v382 = vand.u32 %v381, 4294901760
        %383 = vmatmul.mubr.f32.gmra.mxu0 %v382
        %v384 = vpop.f32.mrf.mxu0
        %v385 = vadd.f32 0.0, %v384
        %v386 = vpop.f32.mrf.mxu0
        %387 = vmatprep.mubr.f32.mxu0 0.0
        %v388 = vand.u32 %v239, 4294901760
        %v389 = vsub.f32 %v239, %v388
        %v390 = vand.u32 %v389, 4294901760
        %v391 = vsub.f32 %v389, %v390
        %v392 = vand.u32 %v391, 4294901760
        %393 = vmatmul.mubr.f32.gmra.mxu0 %v392
        %v394 = vpop.f32.mrf.mxu0
        %v395 = vadd.f32 0.0, %v394
        %v396 = vpop.f32.mrf.mxu0
        %397 = vmatprep.mubr.f32.mxu0 0.0
        %v398 = vand.u32 %v242, 4294901760
        %v399 = vsub.f32 %v242, %v398
        %v400 = vand.u32 %v399, 4294901760
        %v401 = vsub.f32 %v399, %v400
        %v402 = vand.u32 %v401, 4294901760
        %403 = vmatmul.mubr.f32.gmra.mxu0 %v402
        %v404 = vpop.f32.mrf.mxu0
        %v405 = vadd.f32 0.0, %v404
        %v406 = vpop.f32.mrf.mxu0
        %407 = vmatprep.mubr.f32.mxu0 0.0
        %v408 = vand.u32 %v245, 4294901760
        %v409 = vsub.f32 %v245, %v408
        %v410 = vand.u32 %v409, 4294901760
        %v411 = vsub.f32 %v409, %v410
        %v412 = vand.u32 %v411, 4294901760
        %413 = vmatmul.mubr.f32.gmra.mxu0 %v412
        %v414 = vpop.f32.mrf.mxu0
        %v415 = vadd.f32 0.0, %v414
        %v416 = vpop.f32.mrf.mxu0
        %417 = vmatprep.mubr.f32.mxu0 0.0
        %v418 = vand.u32 %v248, 4294901760
        %v419 = vsub.f32 %v248, %v418
        %v420 = vand.u32 %v419, 4294901760
        %v421 = vsub.f32 %v419, %v420
        %v422 = vand.u32 %v421, 4294901760
        %423 = vmatmul.mubr.f32.gmra.mxu0 %v422
        %v424 = vpop.f32.mrf.mxu0
        %v425 = vadd.f32 0.0, %v424
        %v426 = vpop.f32.mrf.mxu0
        %427 = vmatprep.mubr.f32.mxu0 0.0
        %v428 = vand.u32 %v251, 4294901760
        %v429 = vsub.f32 %v251, %v428
        %v430 = vand.u32 %v429, 4294901760
        %v431 = vsub.f32 %v429, %v430
        %v432 = vand.u32 %v431, 4294901760
        %433 = vmatmul.mubr.f32.gmra.mxu0 %v432
        %v434 = vpop.f32.mrf.mxu0
        %v435 = vadd.f32 0.0, %v434
        %v436 = vpop.f32.mrf.mxu0
        %437 = vmatprep.mubr.f32.mxu0 0.0
        %v438 = vand.u32 %v254, 4294901760
        %v439 = vsub.f32 %v254, %v438
        %v440 = vand.u32 %v439, 4294901760
        %v441 = vsub.f32 %v439, %v440
        %v442 = vand.u32 %v441, 4294901760
        %443 = vmatmul.mubr.f32.gmra.mxu0 %v442
        %v444 = vpop.f32.mrf.mxu0
        %v445 = vadd.f32 0.0, %v444
        %v446 = vpop.f32.mrf.mxu0
        %447 = vmatprep.mubr.f32.mxu0 0.0
        %v448 = vand.u32 %v257, 4294901760
        %v449 = vsub.f32 %v257, %v448
        %v450 = vand.u32 %v449, 4294901760
        %v451 = vsub.f32 %v449, %v450
        %v452 = vand.u32 %v451, 4294901760
        %453 = vmatmul.mubr.f32.gmra.mxu0 %v452
        %v454 = vpop.f32.mrf.mxu0
        %v455 = vadd.f32 0.0, %v454
        %v456 = vpop.f32.mrf.mxu0
        %457 = vmatprep.mubr.f32.mxu0 0.0
        %v458 = vand.u32 %v260, 4294901760
        %v459 = vsub.f32 %v260, %v458
        %v460 = vand.u32 %v459, 4294901760
        %v461 = vsub.f32 %v459, %v460
        %v462 = vand.u32 %v461, 4294901760
        %463 = vmatmul.mubr.f32.gmra.mxu0 %v462
        %v464 = vpop.f32.mrf.mxu0
        %v465 = vadd.f32 0.0, %v464
        %v466 = vpop.f32.mrf.mxu0
        %467 = vmatprep.mubr.f32.mxu0 0.0
        %v468 = vand.u32 %v263, 4294901760
        %v469 = vsub.f32 %v263, %v468
        %v470 = vand.u32 %v469, 4294901760
        %v471 = vsub.f32 %v469, %v470
        %v472 = vand.u32 %v471, 4294901760
        %473 = vmatmul.mubr.f32.gmra.mxu0 %v472
        %v474 = vpop.f32.mrf.mxu0
        %v475 = vadd.f32 0.0, %v474
        %v476 = vpop.f32.mrf.mxu0
        %477 = vmatprep.mubr.f32.mxu0 0.0
        %v478 = vand.u32 %v266, 4294901760
        %v479 = vsub.f32 %v266, %v478
        %v480 = vand.u32 %v479, 4294901760
        %v481 = vsub.f32 %v479, %v480
        %v482 = vand.u32 %v481, 4294901760
        %483 = vmatmul.mubr.f32.gmra.mxu0 %v482
        %v484 = vpop.f32.mrf.mxu0
        %v485 = vadd.f32 0.0, %v484
        %v486 = vpop.f32.mrf.mxu0
        %487 = vmatprep.mubr.f32.mxu0 0.0
        %v488 = vand.u32 %v269, 4294901760
        %v489 = vsub.f32 %v269, %v488
        %v490 = vand.u32 %v489, 4294901760
        %v491 = vsub.f32 %v489, %v490
        %v492 = vand.u32 %v491, 4294901760
        %493 = vmatmul.mubr.f32.gmra.mxu0 %v492
        %v494 = vpop.f32.mrf.mxu0
        %v495 = vadd.f32 0.0, %v494
        %v496 = vpop.f32.mrf.mxu0
        %497 = vdwg.mxu0
        %498 = vmatprep.subr.mxu0 0.0
        %499 = vmatpush1.msra.mxu0 0.0
        %500 = vmatprep.subr.mxu0 0.0
        %501 = vmatpush1.msra.mxu0 0.0
        %502 = vmatprep.subr.mxu0 0.0
        %503 = vmatpush1.msra.mxu0 0.0
        %504 = vmatprep.subr.mxu0 0.0
        %505 = vmatpush1.msra.mxu0 0.0
        %506 = vmatprep.subr.mxu0 0.0
        %507 = vmatpush1.msra.mxu0 0.0
        %508 = vmatprep.subr.mxu0 0.0
        %509 = vmatpush1.msra.mxu0 0.0
        %510 = vmatprep.subr.mxu0 0.0
        %511 = vmatpush1.msra.mxu0 0.0
        %512 = vmatprep.subr.mxu0 0.0
        %513 = vmatpush1.msra.mxu0 0.0
        %514 = vmatprep.subr.mxu0 0.0
        %515 = vmatpush1.msra.mxu0 0.0
        %516 = vmatprep.subr.mxu0 0.0
        %517 = vmatpush1.msra.mxu0 0.0
        %518 = vmatprep.subr.mxu0 0.0
        %519 = vmatpush1.msra.mxu0 0.0
        %520 = vmatprep.subr.mxu0 0.0
        %521 = vmatpush1.msra.mxu0 0.0
        %522 = vmatprep.subr.mxu0 0.0
        %523 = vmatpush1.msra.mxu0 0.0
        %524 = vmatprep.subr.mxu0 0.0
        %525 = vmatpush1.msra.mxu0 0.0
        %526 = vmatprep.subr.mxu0 0.0
        %v527 = vand.u32 %v173, 4294901760
        %v528 = vsub.f32 %v173, %v527
        %v529 = vand.u32 %v528, 4294901760
        %v530 = vsub.f32 %v528, %v529
        %v531 = vand.u32 %v530, 4294901760
        %532 = vmatpush1.msra.mxu0 %v531
        %533 = vmatprep.subr.mxu0 0.0
        %v534 = vand.u32 %v172, 4294901760
        %v535 = vsub.f32 %v172, %v534
        %v536 = vand.u32 %v535, 4294901760
        %v537 = vsub.f32 %v535, %v536
        %v538 = vand.u32 %v537, 4294901760
        %539 = vmatpush1.msra.mxu0 %v538
        %540 = vmatprep.subr.mxu0 0.0
        %541 = vmatpush2.msra.mxu0 0.0
        %542 = vmatprep.subr.mxu0 0.0
        %543 = vmatpush2.msra.mxu0 0.0
        %544 = vmatprep.subr.mxu0 0.0
        %545 = vmatpush2.msra.mxu0 0.0
        %546 = vmatprep.subr.mxu0 0.0
        %547 = vmatpush2.msra.mxu0 0.0
        %548 = vmatprep.subr.mxu0 0.0
        %549 = vmatpush2.msra.mxu0 0.0
        %550 = vmatprep.subr.mxu0 0.0
        %551 = vmatpush2.msra.mxu0 0.0
        %552 = vmatprep.subr.mxu0 0.0
        %553 = vmatpush2.msra.mxu0 0.0
        %554 = vmatprep.subr.mxu0 0.0
        %555 = vmatpush2.msra.mxu0 0.0
        %556 = vmatprep.subr.mxu0 0.0
        %557 = vmatpush2.msra.mxu0 0.0
        %558 = vmatprep.subr.mxu0 0.0
        %559 = vmatpush2.msra.mxu0 0.0
        %560 = vmatprep.subr.mxu0 0.0
        %561 = vmatpush2.msra.mxu0 0.0
        %562 = vmatprep.subr.mxu0 0.0
        %563 = vmatpush2.msra.mxu0 0.0
        %564 = vmatprep.subr.mxu0 0.0
        %565 = vmatpush2.msra.mxu0 0.0
        %566 = vmatprep.subr.mxu0 0.0
        %567 = vmatpush2.msra.mxu0 0.0
        %568 = vmatprep.subr.mxu0 0.0
        %569 = vmatpush2.msra.mxu0 0.0
        %570 = vmatprep.subr.mxu0 0.0
        %571 = vmatpush2.msra.mxu0 0.0
        %572 = vmatprep.mubr.f32.mxu0 0.0
        %v573 = vand.u32 %v224, 4294901760
        %574 = vmatmul.mubr.f32.gmra.mxu0 %v573
        %v575 = vpop.f32.mrf.mxu0
        %v576 = vadd.f32 %v345, %v575
        %v577 = vpop.f32.mrf.mxu0
        %578 = vmatprep.mubr.f32.mxu0 0.0
        %v579 = vand.u32 %v227, 4294901760
        %580 = vmatmul.mubr.f32.gmra.mxu0 %v579
        %v581 = vpop.f32.mrf.mxu0
        %v582 = vadd.f32 %v355, %v581
        %v583 = vpop.f32.mrf.mxu0
        %584 = vmatprep.mubr.f32.mxu0 0.0
        %v585 = vand.u32 %v230, 4294901760
        %586 = vmatmul.mubr.f32.gmra.mxu0 %v585
        %v587 = vpop.f32.mrf.mxu0
        %v588 = vadd.f32 %v365, %v587
        %v589 = vpop.f32.mrf.mxu0
        %590 = vmatprep.mubr.f32.mxu0 0.0
        %v591 = vand.u32 %v233, 4294901760
        %592 = vmatmul.mubr.f32.gmra.mxu0 %v591
        %v593 = vpop.f32.mrf.mxu0
        %v594 = vadd.f32 %v375, %v593
        %v595 = vpop.f32.mrf.mxu0
        %596 = vmatprep.mubr.f32.mxu0 0.0
        %v597 = vand.u32 %v236, 4294901760
        %598 = vmatmul.mubr.f32.gmra.mxu0 %v597
        %v599 = vpop.f32.mrf.mxu0
        %v600 = vadd.f32 %v385, %v599
        %v601 = vpop.f32.mrf.mxu0
        %602 = vmatprep.mubr.f32.mxu0 0.0
        %v603 = vand.u32 %v239, 4294901760
        %604 = vmatmul.mubr.f32.gmra.mxu0 %v603
        %v605 = vpop.f32.mrf.mxu0
        %v606 = vadd.f32 %v395, %v605
        %v607 = vpop.f32.mrf.mxu0
        %608 = vmatprep.mubr.f32.mxu0 0.0
        %v609 = vand.u32 %v242, 4294901760
        %610 = vmatmul.mubr.f32.gmra.mxu0 %v609
        %v611 = vpop.f32.mrf.mxu0
        %v612 = vadd.f32 %v405, %v611
        %v613 = vpop.f32.mrf.mxu0
        %614 = vmatprep.mubr.f32.mxu0 0.0
        %v615 = vand.u32 %v245, 4294901760
        %616 = vmatmul.mubr.f32.gmra.mxu0 %v615
        %v617 = vpop.f32.mrf.mxu0
        %v618 = vadd.f32 %v415, %v617
        %v619 = vpop.f32.mrf.mxu0
        %620 = vmatprep.mubr.f32.mxu0 0.0
        %v621 = vand.u32 %v248, 4294901760
        %622 = vmatmul.mubr.f32.gmra.mxu0 %v621
        %v623 = vpop.f32.mrf.mxu0
        %v624 = vadd.f32 %v425, %v623
        %v625 = vpop.f32.mrf.mxu0
        %626 = vmatprep.mubr.f32.mxu0 0.0
        %v627 = vand.u32 %v251, 4294901760
        %628 = vmatmul.mubr.f32.gmra.mxu0 %v627
        %v629 = vpop.f32.mrf.mxu0
        %v630 = vadd.f32 %v435, %v629
        %v631 = vpop.f32.mrf.mxu0
        %632 = vmatprep.mubr.f32.mxu0 0.0
        %v633 = vand.u32 %v254, 4294901760
        %634 = vmatmul.mubr.f32.gmra.mxu0 %v633
        %v635 = vpop.f32.mrf.mxu0
        %v636 = vadd.f32 %v445, %v635
        %v637 = vpop.f32.mrf.mxu0
        %638 = vmatprep.mubr.f32.mxu0 0.0
        %v639 = vand.u32 %v257, 4294901760
        %640 = vmatmul.mubr.f32.gmra.mxu0 %v639
        %v641 = vpop.f32.mrf.mxu0
        %v642 = vadd.f32 %v455, %v641
        %v643 = vpop.f32.mrf.mxu0
        %644 = vmatprep.mubr.f32.mxu0 0.0
        %v645 = vand.u32 %v260, 4294901760
        %646 = vmatmul.mubr.f32.gmra.mxu0 %v645
        %v647 = vpop.f32.mrf.mxu0
        %v648 = vadd.f32 %v465, %v647
        %v649 = vpop.f32.mrf.mxu0
        %650 = vmatprep.mubr.f32.mxu0 0.0
        %v651 = vand.u32 %v263, 4294901760
        %652 = vmatmul.mubr.f32.gmra.mxu0 %v651
        %v653 = vpop.f32.mrf.mxu0
        %v654 = vadd.f32 %v475, %v653
        %v655 = vpop.f32.mrf.mxu0
        %656 = vmatprep.mubr.f32.mxu0 0.0
        %v657 = vand.u32 %v266, 4294901760
        %658 = vmatmul.mubr.f32.gmra.mxu0 %v657
        %v659 = vpop.f32.mrf.mxu0
        %v660 = vadd.f32 %v485, %v659
        %v661 = vpop.f32.mrf.mxu0
        %662 = vmatprep.mubr.f32.mxu0 0.0
        %v663 = vand.u32 %v269, 4294901760
        %664 = vmatmul.mubr.f32.gmra.mxu0 %v663
        %v665 = vpop.f32.mrf.mxu0
        %v666 = vadd.f32 %v495, %v665
        %v667 = vpop.f32.mrf.mxu0
        %668 = vdwg.mxu0
        %669 = vmatprep.subr.mxu0 0.0
        %670 = vmatpush1.msra.mxu0 0.0
        %671 = vmatprep.subr.mxu0 0.0
        %672 = vmatpush1.msra.mxu0 0.0
        %673 = vmatprep.subr.mxu0 0.0
        %674 = vmatpush1.msra.mxu0 0.0
        %675 = vmatprep.subr.mxu0 0.0
        %676 = vmatpush1.msra.mxu0 0.0
        %677 = vmatprep.subr.mxu0 0.0
        %678 = vmatpush1.msra.mxu0 0.0
        %679 = vmatprep.subr.mxu0 0.0
        %680 = vmatpush1.msra.mxu0 0.0
        %681 = vmatprep.subr.mxu0 0.0
        %682 = vmatpush1.msra.mxu0 0.0
        %683 = vmatprep.subr.mxu0 0.0
        %684 = vmatpush1.msra.mxu0 0.0
        %685 = vmatprep.subr.mxu0 0.0
        %686 = vmatpush1.msra.mxu0 0.0
        %687 = vmatprep.subr.mxu0 0.0
        %688 = vmatpush1.msra.mxu0 0.0
        %689 = vmatprep.subr.mxu0 0.0
        %690 = vmatpush1.msra.mxu0 0.0
        %691 = vmatprep.subr.mxu0 0.0
        %692 = vmatpush1.msra.mxu0 0.0
        %693 = vmatprep.subr.mxu0 0.0
        %694 = vmatpush1.msra.mxu0 0.0
        %695 = vmatprep.subr.mxu0 0.0
        %696 = vmatpush1.msra.mxu0 0.0
        %697 = vmatprep.subr.mxu0 0.0
        %v698 = vand.u32 %v173, 4294901760
        %v699 = vsub.f32 %v173, %v698
        %700 = vmatpush1.msra.mxu0 %v699
        %701 = vmatprep.subr.mxu0 0.0
        %v702 = vand.u32 %v172, 4294901760
        %v703 = vsub.f32 %v172, %v702
        %704 = vmatpush1.msra.mxu0 %v703
        %705 = vmatprep.subr.mxu0 0.0
        %706 = vmatpush2.msra.mxu0 0.0
        %707 = vmatprep.subr.mxu0 0.0
        %708 = vmatpush2.msra.mxu0 0.0
        %709 = vmatprep.subr.mxu0 0.0
        %710 = vmatpush2.msra.mxu0 0.0
        %711 = vmatprep.subr.mxu0 0.0
        %712 = vmatpush2.msra.mxu0 0.0
        %713 = vmatprep.subr.mxu0 0.0
        %714 = vmatpush2.msra.mxu0 0.0
        %715 = vmatprep.subr.mxu0 0.0
        %716 = vmatpush2.msra.mxu0 0.0
        %717 = vmatprep.subr.mxu0 0.0
        %718 = vmatpush2.msra.mxu0 0.0
        %719 = vmatprep.subr.mxu0 0.0
        %720 = vmatpush2.msra.mxu0 0.0
        %721 = vmatprep.subr.mxu0 0.0
        %722 = vmatpush2.msra.mxu0 0.0
        %723 = vmatprep.subr.mxu0 0.0
        %724 = vmatpush2.msra.mxu0 0.0
        %725 = vmatprep.subr.mxu0 0.0
        %726 = vmatpush2.msra.mxu0 0.0
        %727 = vmatprep.subr.mxu0 0.0
        %728 = vmatpush2.msra.mxu0 0.0
        %729 = vmatprep.subr.mxu0 0.0
        %730 = vmatpush2.msra.mxu0 0.0
        %731 = vmatprep.subr.mxu0 0.0
        %732 = vmatpush2.msra.mxu0 0.0
        %733 = vmatprep.subr.mxu0 0.0
        %734 = vmatpush2.msra.mxu0 0.0
        %735 = vmatprep.subr.mxu0 0.0
        %736 = vmatpush2.msra.mxu0 0.0
        %737 = vmatprep.mubr.f32.mxu0 0.0
        %v738 = vand.u32 %v224, 4294901760
        %v739 = vsub.f32 %v224, %v738
        %740 = vmatmul.mubr.f32.gmra.mxu0 %v739
        %v741 = vpop.f32.mrf.mxu0
        %v742 = vadd.f32 %v576, %v741
        %v743 = vpop.f32.mrf.mxu0
        %744 = vmatprep.mubr.f32.mxu0 0.0
        %v745 = vand.u32 %v227, 4294901760
        %v746 = vsub.f32 %v227, %v745
        %747 = vmatmul.mubr.f32.gmra.mxu0 %v746
        %v748 = vpop.f32.mrf.mxu0
        %v749 = vadd.f32 %v582, %v748
        %v750 = vpop.f32.mrf.mxu0
        %751 = vmatprep.mubr.f32.mxu0 0.0
        %v752 = vand.u32 %v230, 4294901760
        %v753 = vsub.f32 %v230, %v752
        %754 = vmatmul.mubr.f32.gmra.mxu0 %v753
        %v755 = vpop.f32.mrf.mxu0
        %v756 = vadd.f32 %v588, %v755
        %v757 = vpop.f32.mrf.mxu0
        %758 = vmatprep.mubr.f32.mxu0 0.0
        %v759 = vand.u32 %v233, 4294901760
        %v760 = vsub.f32 %v233, %v759
        %761 = vmatmul.mubr.f32.gmra.mxu0 %v760
        %v762 = vpop.f32.mrf.mxu0
        %v763 = vadd.f32 %v594, %v762
        %v764 = vpop.f32.mrf.mxu0
        %765 = vmatprep.mubr.f32.mxu0 0.0
        %v766 = vand.u32 %v236, 4294901760
        %v767 = vsub.f32 %v236, %v766
        %768 = vmatmul.mubr.f32.gmra.mxu0 %v767
        %v769 = vpop.f32.mrf.mxu0
        %v770 = vadd.f32 %v600, %v769
        %v771 = vpop.f32.mrf.mxu0
        %772 = vmatprep.mubr.f32.mxu0 0.0
        %v773 = vand.u32 %v239, 4294901760
        %v774 = vsub.f32 %v239, %v773
        %775 = vmatmul.mubr.f32.gmra.mxu0 %v774
        %v776 = vpop.f32.mrf.mxu0
        %v777 = vadd.f32 %v606, %v776
        %v778 = vpop.f32.mrf.mxu0
        %779 = vmatprep.mubr.f32.mxu0 0.0
        %v780 = vand.u32 %v242, 4294901760
        %v781 = vsub.f32 %v242, %v780
        %782 = vmatmul.mubr.f32.gmra.mxu0 %v781
        %v783 = vpop.f32.mrf.mxu0
        %v784 = vadd.f32 %v612, %v783
        %v785 = vpop.f32.mrf.mxu0
        %786 = vmatprep.mubr.f32.mxu0 0.0
        %v787 = vand.u32 %v245, 4294901760
        %v788 = vsub.f32 %v245, %v787
        %789 = vmatmul.mubr.f32.gmra.mxu0 %v788
        %v790 = vpop.f32.mrf.mxu0
        %v791 = vadd.f32 %v618, %v790
        %v792 = vpop.f32.mrf.mxu0
        %793 = vmatprep.mubr.f32.mxu0 0.0
        %v794 = vand.u32 %v248, 4294901760
        %v795 = vsub.f32 %v248, %v794
        %796 = vmatmul.mubr.f32.gmra.mxu0 %v795
        %v797 = vpop.f32.mrf.mxu0
        %v798 = vadd.f32 %v624, %v797
        %v799 = vpop.f32.mrf.mxu0
        %800 = vmatprep.mubr.f32.mxu0 0.0
        %v801 = vand.u32 %v251, 4294901760
        %v802 = vsub.f32 %v251, %v801
        %803 = vmatmul.mubr.f32.gmra.mxu0 %v802
        %v804 = vpop.f32.mrf.mxu0
        %v805 = vadd.f32 %v630, %v804
        %v806 = vpop.f32.mrf.mxu0
        %807 = vmatprep.mubr.f32.mxu0 0.0
        %v808 = vand.u32 %v254, 4294901760
        %v809 = vsub.f32 %v254, %v808
        %810 = vmatmul.mubr.f32.gmra.mxu0 %v809
        %v811 = vpop.f32.mrf.mxu0
        %v812 = vadd.f32 %v636, %v811
        %v813 = vpop.f32.mrf.mxu0
        %814 = vmatprep.mubr.f32.mxu0 0.0
        %v815 = vand.u32 %v257, 4294901760
        %v816 = vsub.f32 %v257, %v815
        %817 = vmatmul.mubr.f32.gmra.mxu0 %v816
        %v818 = vpop.f32.mrf.mxu0
        %v819 = vadd.f32 %v642, %v818
        %v820 = vpop.f32.mrf.mxu0
        %821 = vmatprep.mubr.f32.mxu0 0.0
        %v822 = vand.u32 %v260, 4294901760
        %v823 = vsub.f32 %v260, %v822
        %824 = vmatmul.mubr.f32.gmra.mxu0 %v823
        %v825 = vpop.f32.mrf.mxu0
        %v826 = vadd.f32 %v648, %v825
        %v827 = vpop.f32.mrf.mxu0
        %828 = vmatprep.mubr.f32.mxu0 0.0
        %v829 = vand.u32 %v263, 4294901760
        %v830 = vsub.f32 %v263, %v829
        %831 = vmatmul.mubr.f32.gmra.mxu0 %v830
        %v832 = vpop.f32.mrf.mxu0
        %v833 = vadd.f32 %v654, %v832
        %v834 = vpop.f32.mrf.mxu0
        %835 = vmatprep.mubr.f32.mxu0 0.0
        %v836 = vand.u32 %v266, 4294901760
        %v837 = vsub.f32 %v266, %v836
        %838 = vmatmul.mubr.f32.gmra.mxu0 %v837
        %v839 = vpop.f32.mrf.mxu0
        %v840 = vadd.f32 %v660, %v839
        %v841 = vpop.f32.mrf.mxu0
        %842 = vmatprep.mubr.f32.mxu0 0.0
        %v843 = vand.u32 %v269, 4294901760
        %v844 = vsub.f32 %v269, %v843
        %845 = vmatmul.mubr.f32.gmra.mxu0 %v844
        %v846 = vpop.f32.mrf.mxu0
        %v847 = vadd.f32 %v666, %v846
        %v848 = vpop.f32.mrf.mxu0
        %849 = vdwg.mxu0
        %850 = vmatprep.subr.mxu0 0.0
        %851 = vmatpush1.msra.mxu0 0.0
        %852 = vmatprep.subr.mxu0 0.0
        %853 = vmatpush1.msra.mxu0 0.0
        %854 = vmatprep.subr.mxu0 0.0
        %855 = vmatpush1.msra.mxu0 0.0
        %856 = vmatprep.subr.mxu0 0.0
        %857 = vmatpush1.msra.mxu0 0.0
        %858 = vmatprep.subr.mxu0 0.0
        %859 = vmatpush1.msra.mxu0 0.0
        %860 = vmatprep.subr.mxu0 0.0
        %861 = vmatpush1.msra.mxu0 0.0
        %862 = vmatprep.subr.mxu0 0.0
        %863 = vmatpush1.msra.mxu0 0.0
        %864 = vmatprep.subr.mxu0 0.0
        %865 = vmatpush1.msra.mxu0 0.0
        %866 = vmatprep.subr.mxu0 0.0
        %867 = vmatpush1.msra.mxu0 0.0
        %868 = vmatprep.subr.mxu0 0.0
        %869 = vmatpush1.msra.mxu0 0.0
        %870 = vmatprep.subr.mxu0 0.0
        %871 = vmatpush1.msra.mxu0 0.0
        %872 = vmatprep.subr.mxu0 0.0
        %873 = vmatpush1.msra.mxu0 0.0
        %874 = vmatprep.subr.mxu0 0.0
        %875 = vmatpush1.msra.mxu0 0.0
        %876 = vmatprep.subr.mxu0 0.0
        %877 = vmatpush1.msra.mxu0 0.0
        %878 = vmatprep.subr.mxu0 0.0
        %v879 = vand.u32 %v173, 4294901760
        %880 = vmatpush1.msra.mxu0 %v879
        %881 = vmatprep.subr.mxu0 0.0
        %v882 = vand.u32 %v172, 4294901760
        %883 = vmatpush1.msra.mxu0 %v882
        %884 = vmatprep.subr.mxu0 0.0
        %885 = vmatpush2.msra.mxu0 0.0
        %886 = vmatprep.subr.mxu0 0.0
        %887 = vmatpush2.msra.mxu0 0.0
        %888 = vmatprep.subr.mxu0 0.0
        %889 = vmatpush2.msra.mxu0 0.0
        %890 = vmatprep.subr.mxu0 0.0
        %891 = vmatpush2.msra.mxu0 0.0
        %892 = vmatprep.subr.mxu0 0.0
        %893 = vmatpush2.msra.mxu0 0.0
        %894 = vmatprep.subr.mxu0 0.0
        %895 = vmatpush2.msra.mxu0 0.0
        %896 = vmatprep.subr.mxu0 0.0
        %897 = vmatpush2.msra.mxu0 0.0
        %898 = vmatprep.subr.mxu0 0.0
        %899 = vmatpush2.msra.mxu0 0.0
        %900 = vmatprep.subr.mxu0 0.0
        %901 = vmatpush2.msra.mxu0 0.0
        %902 = vmatprep.subr.mxu0 0.0
        %903 = vmatpush2.msra.mxu0 0.0
        %904 = vmatprep.subr.mxu0 0.0
        %905 = vmatpush2.msra.mxu0 0.0
        %906 = vmatprep.subr.mxu0 0.0
        %907 = vmatpush2.msra.mxu0 0.0
        %908 = vmatprep.subr.mxu0 0.0
        %909 = vmatpush2.msra.mxu0 0.0
        %910 = vmatprep.subr.mxu0 0.0
        %911 = vmatpush2.msra.mxu0 0.0
        %912 = vmatprep.subr.mxu0 0.0
        %913 = vmatpush2.msra.mxu0 0.0
        %914 = vmatprep.subr.mxu0 0.0
        %915 = vmatpush2.msra.mxu0 0.0
        %916 = vmatprep.mubr.f32.mxu0 0.0
        %v917 = vand.u32 %v224, 4294901760
        %v918 = vsub.f32 %v224, %v917
        %v919 = vand.u32 %v918, 4294901760
        %920 = vmatmul.mubr.f32.gmra.mxu0 %v919
        %v921 = vpop.f32.mrf.mxu0
        %v922 = vadd.f32 %v742, %v921
        %v923 = vpop.f32.mrf.mxu0
        %924 = vmatprep.mubr.f32.mxu0 0.0
        %v925 = vand.u32 %v227, 4294901760
        %v926 = vsub.f32 %v227, %v925
        %v927 = vand.u32 %v926, 4294901760
        %928 = vmatmul.mubr.f32.gmra.mxu0 %v927
        %v929 = vpop.f32.mrf.mxu0
        %v930 = vadd.f32 %v749, %v929
        %v931 = vpop.f32.mrf.mxu0
        %932 = vmatprep.mubr.f32.mxu0 0.0
        %v933 = vand.u32 %v230, 4294901760
        %v934 = vsub.f32 %v230, %v933
        %v935 = vand.u32 %v934, 4294901760
        %936 = vmatmul.mubr.f32.gmra.mxu0 %v935
        %v937 = vpop.f32.mrf.mxu0
        %v938 = vadd.f32 %v756, %v937
        %v939 = vpop.f32.mrf.mxu0
        %940 = vmatprep.mubr.f32.mxu0 0.0
        %v941 = vand.u32 %v233, 4294901760
        %v942 = vsub.f32 %v233, %v941
        %v943 = vand.u32 %v942, 4294901760
        %944 = vmatmul.mubr.f32.gmra.mxu0 %v943
        %v945 = vpop.f32.mrf.mxu0
        %v946 = vadd.f32 %v763, %v945
        %v947 = vpop.f32.mrf.mxu0
        %948 = vmatprep.mubr.f32.mxu0 0.0
        %v949 = vand.u32 %v236, 4294901760
        %v950 = vsub.f32 %v236, %v949
        %v951 = vand.u32 %v950, 4294901760
        %952 = vmatmul.mubr.f32.gmra.mxu0 %v951
        %v953 = vpop.f32.mrf.mxu0
        %v954 = vadd.f32 %v770, %v953
        %v955 = vpop.f32.mrf.mxu0
        %956 = vmatprep.mubr.f32.mxu0 0.0
        %v957 = vand.u32 %v239, 4294901760
        %v958 = vsub.f32 %v239, %v957
        %v959 = vand.u32 %v958, 4294901760
        %960 = vmatmul.mubr.f32.gmra.mxu0 %v959
        %v961 = vpop.f32.mrf.mxu0
        %v962 = vadd.f32 %v777, %v961
        %v963 = vpop.f32.mrf.mxu0
        %964 = vmatprep.mubr.f32.mxu0 0.0
        %v965 = vand.u32 %v242, 4294901760
        %v966 = vsub.f32 %v242, %v965
        %v967 = vand.u32 %v966, 4294901760
        %968 = vmatmul.mubr.f32.gmra.mxu0 %v967
        %v969 = vpop.f32.mrf.mxu0
        %v970 = vadd.f32 %v784, %v969
        %v971 = vpop.f32.mrf.mxu0
        %972 = vmatprep.mubr.f32.mxu0 0.0
        %v973 = vand.u32 %v245, 4294901760
        %v974 = vsub.f32 %v245, %v973
        %v975 = vand.u32 %v974, 4294901760
        %976 = vmatmul.mubr.f32.gmra.mxu0 %v975
        %v977 = vpop.f32.mrf.mxu0
        %v978 = vadd.f32 %v791, %v977
        %v979 = vpop.f32.mrf.mxu0
        %980 = vmatprep.mubr.f32.mxu0 0.0
        %v981 = vand.u32 %v248, 4294901760
        %v982 = vsub.f32 %v248, %v981
        %v983 = vand.u32 %v982, 4294901760
        %984 = vmatmul.mubr.f32.gmra.mxu0 %v983
        %v985 = vpop.f32.mrf.mxu0
        %v986 = vadd.f32 %v798, %v985
        %v987 = vpop.f32.mrf.mxu0
        %988 = vmatprep.mubr.f32.mxu0 0.0
        %v989 = vand.u32 %v251, 4294901760
        %v990 = vsub.f32 %v251, %v989
        %v991 = vand.u32 %v990, 4294901760
        %992 = vmatmul.mubr.f32.gmra.mxu0 %v991
        %v993 = vpop.f32.mrf.mxu0
        %v994 = vadd.f32 %v805, %v993
        %v995 = vpop.f32.mrf.mxu0
        %996 = vmatprep.mubr.f32.mxu0 0.0
        %v997 = vand.u32 %v254, 4294901760
        %v998 = vsub.f32 %v254, %v997
        %v999 = vand.u32 %v998, 4294901760
        %1000 = vmatmul.mubr.f32.gmra.mxu0 %v999
        %v1001 = vpop.f32.mrf.mxu0
        %v1002 = vadd.f32 %v812, %v1001
        %v1003 = vpop.f32.mrf.mxu0
        %1004 = vmatprep.mubr.f32.mxu0 0.0
        %v1005 = vand.u32 %v257, 4294901760
        %v1006 = vsub.f32 %v257, %v1005
        %v1007 = vand.u32 %v1006, 4294901760
        %1008 = vmatmul.mubr.f32.gmra.mxu0 %v1007
        %v1009 = vpop.f32.mrf.mxu0
        %v1010 = vadd.f32 %v819, %v1009
        %v1011 = vpop.f32.mrf.mxu0
        %1012 = vmatprep.mubr.f32.mxu0 0.0
        %v1013 = vand.u32 %v260, 4294901760
        %v1014 = vsub.f32 %v260, %v1013
        %v1015 = vand.u32 %v1014, 4294901760
        %1016 = vmatmul.mubr.f32.gmra.mxu0 %v1015
        %v1017 = vpop.f32.mrf.mxu0
        %v1018 = vadd.f32 %v826, %v1017
        %v1019 = vpop.f32.mrf.mxu0
        %1020 = vmatprep.mubr.f32.mxu0 0.0
        %v1021 = vand.u32 %v263, 4294901760
        %v1022 = vsub.f32 %v263, %v1021
        %v1023 = vand.u32 %v1022, 4294901760
        %1024 = vmatmul.mubr.f32.gmra.mxu0 %v1023
        %v1025 = vpop.f32.mrf.mxu0
        %v1026 = vadd.f32 %v833, %v1025
        %v1027 = vpop.f32.mrf.mxu0
        %1028 = vmatprep.mubr.f32.mxu0 0.0
        %v1029 = vand.u32 %v266, 4294901760
        %v1030 = vsub.f32 %v266, %v1029
        %v1031 = vand.u32 %v1030, 4294901760
        %1032 = vmatmul.mubr.f32.gmra.mxu0 %v1031
        %v1033 = vpop.f32.mrf.mxu0
        %v1034 = vadd.f32 %v840, %v1033
        %v1035 = vpop.f32.mrf.mxu0
        %1036 = vmatprep.mubr.f32.mxu0 0.0
        %v1037 = vand.u32 %v269, 4294901760
        %v1038 = vsub.f32 %v269, %v1037
        %v1039 = vand.u32 %v1038, 4294901760
        %1040 = vmatmul.mubr.f32.gmra.mxu0 %v1039
        %v1041 = vpop.f32.mrf.mxu0
        %v1042 = vadd.f32 %v847, %v1041
        %v1043 = vpop.f32.mrf.mxu0
        %1044 = vdwg.mxu0
        %1045 = vmatprep.subr.mxu0 0.0
        %1046 = vmatpush1.msra.mxu0 0.0
        %1047 = vmatprep.subr.mxu0 0.0
        %1048 = vmatpush1.msra.mxu0 0.0
        %1049 = vmatprep.subr.mxu0 0.0
        %1050 = vmatpush1.msra.mxu0 0.0
        %1051 = vmatprep.subr.mxu0 0.0
        %1052 = vmatpush1.msra.mxu0 0.0
        %1053 = vmatprep.subr.mxu0 0.0
        %1054 = vmatpush1.msra.mxu0 0.0
        %1055 = vmatprep.subr.mxu0 0.0
        %1056 = vmatpush1.msra.mxu0 0.0
        %1057 = vmatprep.subr.mxu0 0.0
        %1058 = vmatpush1.msra.mxu0 0.0
        %1059 = vmatprep.subr.mxu0 0.0
        %1060 = vmatpush1.msra.mxu0 0.0
        %1061 = vmatprep.subr.mxu0 0.0
        %1062 = vmatpush1.msra.mxu0 0.0
        %1063 = vmatprep.subr.mxu0 0.0
        %1064 = vmatpush1.msra.mxu0 0.0
        %1065 = vmatprep.subr.mxu0 0.0
        %1066 = vmatpush1.msra.mxu0 0.0
        %1067 = vmatprep.subr.mxu0 0.0
        %1068 = vmatpush1.msra.mxu0 0.0
        %1069 = vmatprep.subr.mxu0 0.0
        %1070 = vmatpush1.msra.mxu0 0.0
        %1071 = vmatprep.subr.mxu0 0.0
        %1072 = vmatpush1.msra.mxu0 0.0
        %1073 = vmatprep.subr.mxu0 0.0
        %v1074 = vand.u32 %v173, 4294901760
        %v1075 = vsub.f32 %v173, %v1074
        %v1076 = vand.u32 %v1075, 4294901760
        %1077 = vmatpush1.msra.mxu0 %v1076
        %1078 = vmatprep.subr.mxu0 0.0
        %v1079 = vand.u32 %v172, 4294901760
        %v1080 = vsub.f32 %v172, %v1079
        %v1081 = vand.u32 %v1080, 4294901760
        %1082 = vmatpush1.msra.mxu0 %v1081
        %1083 = vmatprep.subr.mxu0 0.0
        %1084 = vmatpush2.msra.mxu0 0.0
        %1085 = vmatprep.subr.mxu0 0.0
        %1086 = vmatpush2.msra.mxu0 0.0
        %1087 = vmatprep.subr.mxu0 0.0
        %1088 = vmatpush2.msra.mxu0 0.0
        %1089 = vmatprep.subr.mxu0 0.0
        %1090 = vmatpush2.msra.mxu0 0.0
        %1091 = vmatprep.subr.mxu0 0.0
        %1092 = vmatpush2.msra.mxu0 0.0
        %1093 = vmatprep.subr.mxu0 0.0
        %1094 = vmatpush2.msra.mxu0 0.0
        %1095 = vmatprep.subr.mxu0 0.0
        %1096 = vmatpush2.msra.mxu0 0.0
        %1097 = vmatprep.subr.mxu0 0.0
        %1098 = vmatpush2.msra.mxu0 0.0
        %1099 = vmatprep.subr.mxu0 0.0
        %1100 = vmatpush2.msra.mxu0 0.0
        %1101 = vmatprep.subr.mxu0 0.0
        %1102 = vmatpush2.msra.mxu0 0.0
        %1103 = vmatprep.subr.mxu0 0.0
        %1104 = vmatpush2.msra.mxu0 0.0
        %1105 = vmatprep.subr.mxu0 0.0
        %1106 = vmatpush2.msra.mxu0 0.0
        %1107 = vmatprep.subr.mxu0 0.0
        %1108 = vmatpush2.msra.mxu0 0.0
        %1109 = vmatprep.subr.mxu0 0.0
        %1110 = vmatpush2.msra.mxu0 0.0
        %1111 = vmatprep.subr.mxu0 0.0
        %1112 = vmatpush2.msra.mxu0 0.0
        %1113 = vmatprep.subr.mxu0 0.0
        %1114 = vmatpush2.msra.mxu0 0.0
        %1115 = vmatprep.mubr.f32.mxu0 0.0
        %v1116 = vand.u32 %v224, 4294901760
        %1117 = vmatmul.mubr.f32.gmra.mxu0 %v1116
        %v1118 = vpop.f32.mrf.mxu0
        %v1119 = vadd.f32 %v922, %v1118
        %v1120 = vpop.f32.mrf.mxu0
        %1121 = vmatprep.mubr.f32.mxu0 0.0
        %v1122 = vand.u32 %v227, 4294901760
        %1123 = vmatmul.mubr.f32.gmra.mxu0 %v1122
        %v1124 = vpop.f32.mrf.mxu0
        %v1125 = vadd.f32 %v930, %v1124
        %v1126 = vpop.f32.mrf.mxu0
        %1127 = vmatprep.mubr.f32.mxu0 0.0
        %v1128 = vand.u32 %v230, 4294901760
        %1129 = vmatmul.mubr.f32.gmra.mxu0 %v1128
        %v1130 = vpop.f32.mrf.mxu0
        %v1131 = vadd.f32 %v938, %v1130
        %v1132 = vpop.f32.mrf.mxu0
        %1133 = vmatprep.mubr.f32.mxu0 0.0
        %v1134 = vand.u32 %v233, 4294901760
        %1135 = vmatmul.mubr.f32.gmra.mxu0 %v1134
        %v1136 = vpop.f32.mrf.mxu0
        %v1137 = vadd.f32 %v946, %v1136
        %v1138 = vpop.f32.mrf.mxu0
        %1139 = vmatprep.mubr.f32.mxu0 0.0
        %v1140 = vand.u32 %v236, 4294901760
        %1141 = vmatmul.mubr.f32.gmra.mxu0 %v1140
        %v1142 = vpop.f32.mrf.mxu0
        %v1143 = vadd.f32 %v954, %v1142
        %v1144 = vpop.f32.mrf.mxu0
        %1145 = vmatprep.mubr.f32.mxu0 0.0
        %v1146 = vand.u32 %v239, 4294901760
        %1147 = vmatmul.mubr.f32.gmra.mxu0 %v1146
        %v1148 = vpop.f32.mrf.mxu0
        %v1149 = vadd.f32 %v962, %v1148
        %v1150 = vpop.f32.mrf.mxu0
        %1151 = vmatprep.mubr.f32.mxu0 0.0
        %v1152 = vand.u32 %v242, 4294901760
        %1153 = vmatmul.mubr.f32.gmra.mxu0 %v1152
        %v1154 = vpop.f32.mrf.mxu0
        %v1155 = vadd.f32 %v970, %v1154
        %v1156 = vpop.f32.mrf.mxu0
        %1157 = vmatprep.mubr.f32.mxu0 0.0
        %v1158 = vand.u32 %v245, 4294901760
        %1159 = vmatmul.mubr.f32.gmra.mxu0 %v1158
        %v1160 = vpop.f32.mrf.mxu0
        %v1161 = vadd.f32 %v978, %v1160
        %v1162 = vpop.f32.mrf.mxu0
        %1163 = vmatprep.mubr.f32.mxu0 0.0
        %v1164 = vand.u32 %v248, 4294901760
        %1165 = vmatmul.mubr.f32.gmra.mxu0 %v1164
        %v1166 = vpop.f32.mrf.mxu0
        %v1167 = vadd.f32 %v986, %v1166
        %v1168 = vpop.f32.mrf.mxu0
        %1169 = vmatprep.mubr.f32.mxu0 0.0
        %v1170 = vand.u32 %v251, 4294901760
        %1171 = vmatmul.mubr.f32.gmra.mxu0 %v1170
        %v1172 = vpop.f32.mrf.mxu0
        %v1173 = vadd.f32 %v994, %v1172
        %v1174 = vpop.f32.mrf.mxu0
        %1175 = vmatprep.mubr.f32.mxu0 0.0
        %v1176 = vand.u32 %v254, 4294901760
        %1177 = vmatmul.mubr.f32.gmra.mxu0 %v1176
        %v1178 = vpop.f32.mrf.mxu0
        %v1179 = vadd.f32 %v1002, %v1178
        %v1180 = vpop.f32.mrf.mxu0
        %1181 = vmatprep.mubr.f32.mxu0 0.0
        %v1182 = vand.u32 %v257, 4294901760
        %1183 = vmatmul.mubr.f32.gmra.mxu0 %v1182
        %v1184 = vpop.f32.mrf.mxu0
        %v1185 = vadd.f32 %v1010, %v1184
        %v1186 = vpop.f32.mrf.mxu0
        %1187 = vmatprep.mubr.f32.mxu0 0.0
        %v1188 = vand.u32 %v260, 4294901760
        %1189 = vmatmul.mubr.f32.gmra.mxu0 %v1188
        %v1190 = vpop.f32.mrf.mxu0
        %v1191 = vadd.f32 %v1018, %v1190
        %v1192 = vpop.f32.mrf.mxu0
        %1193 = vmatprep.mubr.f32.mxu0 0.0
        %v1194 = vand.u32 %v263, 4294901760
        %1195 = vmatmul.mubr.f32.gmra.mxu0 %v1194
        %v1196 = vpop.f32.mrf.mxu0
        %v1197 = vadd.f32 %v1026, %v1196
        %v1198 = vpop.f32.mrf.mxu0
        %1199 = vmatprep.mubr.f32.mxu0 0.0
        %v1200 = vand.u32 %v266, 4294901760
        %1201 = vmatmul.mubr.f32.gmra.mxu0 %v1200
        %v1202 = vpop.f32.mrf.mxu0
        %v1203 = vadd.f32 %v1034, %v1202
        %v1204 = vpop.f32.mrf.mxu0
        %1205 = vmatprep.mubr.f32.mxu0 0.0
        %v1206 = vand.u32 %v269, 4294901760
        %1207 = vmatmul.mubr.f32.gmra.mxu0 %v1206
        %v1208 = vpop.f32.mrf.mxu0
        %v1209 = vadd.f32 %v1042, %v1208
        %v1210 = vpop.f32.mrf.mxu0
        %1211 = vdwg.mxu0
        %1212 = vmatprep.subr.mxu0 0.0
        %1213 = vmatpush1.msra.mxu0 0.0
        %1214 = vmatprep.subr.mxu0 0.0
        %1215 = vmatpush1.msra.mxu0 0.0
        %1216 = vmatprep.subr.mxu0 0.0
        %1217 = vmatpush1.msra.mxu0 0.0
        %1218 = vmatprep.subr.mxu0 0.0
        %1219 = vmatpush1.msra.mxu0 0.0
        %1220 = vmatprep.subr.mxu0 0.0
        %1221 = vmatpush1.msra.mxu0 0.0
        %1222 = vmatprep.subr.mxu0 0.0
        %1223 = vmatpush1.msra.mxu0 0.0
        %1224 = vmatprep.subr.mxu0 0.0
        %1225 = vmatpush1.msra.mxu0 0.0
        %1226 = vmatprep.subr.mxu0 0.0
        %1227 = vmatpush1.msra.mxu0 0.0
        %1228 = vmatprep.subr.mxu0 0.0
        %1229 = vmatpush1.msra.mxu0 0.0
        %1230 = vmatprep.subr.mxu0 0.0
        %1231 = vmatpush1.msra.mxu0 0.0
        %1232 = vmatprep.subr.mxu0 0.0
        %1233 = vmatpush1.msra.mxu0 0.0
        %1234 = vmatprep.subr.mxu0 0.0
        %1235 = vmatpush1.msra.mxu0 0.0
        %1236 = vmatprep.subr.mxu0 0.0
        %1237 = vmatpush1.msra.mxu0 0.0
        %1238 = vmatprep.subr.mxu0 0.0
        %1239 = vmatpush1.msra.mxu0 0.0
        %1240 = vmatprep.subr.mxu0 0.0
        %v1241 = vand.u32 %v173, 4294901760
        %1242 = vmatpush1.msra.mxu0 %v1241
        %1243 = vmatprep.subr.mxu0 0.0
        %v1244 = vand.u32 %v172, 4294901760
        %1245 = vmatpush1.msra.mxu0 %v1244
        %1246 = vmatprep.subr.mxu0 0.0
        %1247 = vmatpush2.msra.mxu0 0.0
        %1248 = vmatprep.subr.mxu0 0.0
        %1249 = vmatpush2.msra.mxu0 0.0
        %1250 = vmatprep.subr.mxu0 0.0
        %1251 = vmatpush2.msra.mxu0 0.0
        %1252 = vmatprep.subr.mxu0 0.0
        %1253 = vmatpush2.msra.mxu0 0.0
        %1254 = vmatprep.subr.mxu0 0.0
        %1255 = vmatpush2.msra.mxu0 0.0
        %1256 = vmatprep.subr.mxu0 0.0
        %1257 = vmatpush2.msra.mxu0 0.0
        %1258 = vmatprep.subr.mxu0 0.0
        %1259 = vmatpush2.msra.mxu0 0.0
        %1260 = vmatprep.subr.mxu0 0.0
        %1261 = vmatpush2.msra.mxu0 0.0
        %1262 = vmatprep.subr.mxu0 0.0
        %1263 = vmatpush2.msra.mxu0 0.0
        %1264 = vmatprep.subr.mxu0 0.0
        %1265 = vmatpush2.msra.mxu0 0.0
        %1266 = vmatprep.subr.mxu0 0.0
        %1267 = vmatpush2.msra.mxu0 0.0
        %1268 = vmatprep.subr.mxu0 0.0
        %1269 = vmatpush2.msra.mxu0 0.0
        %1270 = vmatprep.subr.mxu0 0.0
        %1271 = vmatpush2.msra.mxu0 0.0
        %1272 = vmatprep.subr.mxu0 0.0
        %1273 = vmatpush2.msra.mxu0 0.0
        %1274 = vmatprep.subr.mxu0 0.0
        %1275 = vmatpush2.msra.mxu0 0.0
        %1276 = vmatprep.subr.mxu0 0.0
        %1277 = vmatpush2.msra.mxu0 0.0
        %1278 = vmatprep.mubr.f32.mxu0 0.0
        %v1279 = vand.u32 %v224, 4294901760
        %1280 = vmatmul.mubr.f32.gmra.mxu0 %v1279
        %v1281 = vpop.f32.mrf.mxu0
        %v1282 = vadd.f32 %v1119, %v1281
        %v1283 = vpop.f32.mrf.mxu0
        %1284 = vmatprep.mubr.f32.mxu0 0.0
        %v1285 = vand.u32 %v227, 4294901760
        %1286 = vmatmul.mubr.f32.gmra.mxu0 %v1285
        %v1287 = vpop.f32.mrf.mxu0
        %v1288 = vadd.f32 %v1125, %v1287
        %v1289 = vpop.f32.mrf.mxu0
        %1290 = vmatprep.mubr.f32.mxu0 0.0
        %v1291 = vand.u32 %v230, 4294901760
        %1292 = vmatmul.mubr.f32.gmra.mxu0 %v1291
        %v1293 = vpop.f32.mrf.mxu0
        %v1294 = vadd.f32 %v1131, %v1293
        %v1295 = vpop.f32.mrf.mxu0
        %1296 = vmatprep.mubr.f32.mxu0 0.0
        %v1297 = vand.u32 %v233, 4294901760
        %1298 = vmatmul.mubr.f32.gmra.mxu0 %v1297
        %v1299 = vpop.f32.mrf.mxu0
        %v1300 = vadd.f32 %v1137, %v1299
        %v1301 = vpop.f32.mrf.mxu0
        %1302 = vmatprep.mubr.f32.mxu0 0.0
        %v1303 = vand.u32 %v236, 4294901760
        %1304 = vmatmul.mubr.f32.gmra.mxu0 %v1303
        %v1305 = vpop.f32.mrf.mxu0
        %v1306 = vadd.f32 %v1143, %v1305
        %v1307 = vpop.f32.mrf.mxu0
        %1308 = vmatprep.mubr.f32.mxu0 0.0
        %v1309 = vand.u32 %v239, 4294901760
        %1310 = vmatmul.mubr.f32.gmra.mxu0 %v1309
        %v1311 = vpop.f32.mrf.mxu0
        %v1312 = vadd.f32 %v1149, %v1311
        %v1313 = vpop.f32.mrf.mxu0
        %1314 = vmatprep.mubr.f32.mxu0 0.0
        %v1315 = vand.u32 %v242, 4294901760
        %1316 = vmatmul.mubr.f32.gmra.mxu0 %v1315
        %v1317 = vpop.f32.mrf.mxu0
        %v1318 = vadd.f32 %v1155, %v1317
        %v1319 = vpop.f32.mrf.mxu0
        %1320 = vmatprep.mubr.f32.mxu0 0.0
        %v1321 = vand.u32 %v245, 4294901760
        %1322 = vmatmul.mubr.f32.gmra.mxu0 %v1321
        %v1323 = vpop.f32.mrf.mxu0
        %v1324 = vadd.f32 %v1161, %v1323
        %v1325 = vpop.f32.mrf.mxu0
        %1326 = vmatprep.mubr.f32.mxu0 0.0
        %v1327 = vand.u32 %v248, 4294901760
        %1328 = vmatmul.mubr.f32.gmra.mxu0 %v1327
        %v1329 = vpop.f32.mrf.mxu0
        %v1330 = vadd.f32 %v1167, %v1329
        %v1331 = vpop.f32.mrf.mxu0
        %1332 = vmatprep.mubr.f32.mxu0 0.0
        %v1333 = vand.u32 %v251, 4294901760
        %1334 = vmatmul.mubr.f32.gmra.mxu0 %v1333
        %v1335 = vpop.f32.mrf.mxu0
        %v1336 = vadd.f32 %v1173, %v1335
        %v1337 = vpop.f32.mrf.mxu0
        %1338 = vmatprep.mubr.f32.mxu0 0.0
        %v1339 = vand.u32 %v254, 4294901760
        %1340 = vmatmul.mubr.f32.gmra.mxu0 %v1339
        %v1341 = vpop.f32.mrf.mxu0
        %v1342 = vadd.f32 %v1179, %v1341
        %v1343 = vpop.f32.mrf.mxu0
        %1344 = vmatprep.mubr.f32.mxu0 0.0
        %v1345 = vand.u32 %v257, 4294901760
        %1346 = vmatmul.mubr.f32.gmra.mxu0 %v1345
        %v1347 = vpop.f32.mrf.mxu0
        %v1348 = vadd.f32 %v1185, %v1347
        %v1349 = vpop.f32.mrf.mxu0
        %1350 = vmatprep.mubr.f32.mxu0 0.0
        %v1351 = vand.u32 %v260, 4294901760
        %1352 = vmatmul.mubr.f32.gmra.mxu0 %v1351
        %v1353 = vpop.f32.mrf.mxu0
        %v1354 = vadd.f32 %v1191, %v1353
        %v1355 = vpop.f32.mrf.mxu0
        %1356 = vmatprep.mubr.f32.mxu0 0.0
        %v1357 = vand.u32 %v263, 4294901760
        %1358 = vmatmul.mubr.f32.gmra.mxu0 %v1357
        %v1359 = vpop.f32.mrf.mxu0
        %v1360 = vadd.f32 %v1197, %v1359
        %v1361 = vpop.f32.mrf.mxu0
        %1362 = vmatprep.mubr.f32.mxu0 0.0
        %v1363 = vand.u32 %v266, 4294901760
        %1364 = vmatmul.mubr.f32.gmra.mxu0 %v1363
        %v1365 = vpop.f32.mrf.mxu0
        %v1366 = vadd.f32 %v1203, %v1365
        %v1367 = vpop.f32.mrf.mxu0
        %1368 = vmatprep.mubr.f32.mxu0 0.0
        %v1369 = vand.u32 %v269, 4294901760
        %1370 = vmatmul.mubr.f32.gmra.mxu0 %v1369
        %v1371 = vpop.f32.mrf.mxu0
        %v1372 = vadd.f32 %v1209, %v1371
        %v1373 = vpop.f32.mrf.mxu0
        %1374 = vdwg.mxu0
        %v1375 = vadd.f32 %v174, %v1282
        %v1376 = vadd.f32 %v175, %v1288
        %v1377 = vadd.f32 %v176, %v1294
        %v1378 = vadd.f32 %v177, %v1300
        %v1379 = vadd.f32 %v178, %v1306
        %v1380 = vadd.f32 %v179, %v1312
        %v1381 = vadd.f32 %v180, %v1318
        %v1382 = vadd.f32 %v181, %v1324
        %v1383 = vadd.f32 %v182, %v1330
        %v1384 = vadd.f32 %v183, %v1336
        %v1385 = vadd.f32 %v184, %v1342
        %v1386 = vadd.f32 %v185, %v1348
        %v1387 = vadd.f32 %v186, %v1354
        %v1388 = vadd.f32 %v187, %v1360
        %v1389 = vadd.f32 %v188, %v1366
        %v1390 = vadd.f32 %v189, %v1372
        %1391 = vst [vmem:[#allocation2] sm:$0xff] %v1375
        %1392 = vst [vmem:[#allocation2 + $0x8] sm:$0xff] %v1376
        %1393 = vst [vmem:[#allocation2 + $0x10] sm:$0xff] %v1377
        %1394 = vst [vmem:[#allocation2 + $0x18] sm:$0xff] %v1378
        %1395 = vst [vmem:[#allocation2 + $0x20] sm:$0xff] %v1379
        %1396 = vst [vmem:[#allocation2 + $0x28] sm:$0xff] %v1380
        %1397 = vst [vmem:[#allocation2 + $0x30] sm:$0xff] %v1381
        %1398 = vst [vmem:[#allocation2 + $0x38] sm:$0xff] %v1382
        %1399 = vst [vmem:[#allocation2 + $0x40] sm:$0xff] %v1383
        %1400 = vst [vmem:[#allocation2 + $0x48] sm:$0xff] %v1384
        %1401 = vst [vmem:[#allocation2 + $0x50] sm:$0xff] %v1385
        %1402 = vst [vmem:[#allocation2 + $0x58] sm:$0xff] %v1386
        %1403 = vst [vmem:[#allocation2 + $0x60] sm:$0xff] %v1387
        %1404 = vst [vmem:[#allocation2 + $0x68] sm:$0xff] %v1388
        %1405 = vst [vmem:[#allocation2 + $0x70] sm:$0xff] %v1389
        %1406 = vst [vmem:[#allocation2 + $0x78] sm:$0xff] %v1390
        // Predicated region
        $region33: #{tpu_custom_call.1} parent=23 // pred_check
          %p1407 = pneg %p152
        $region34: #{tpu_custom_call.1} parent=23 // pred_check_branch
          %1409 = sbr.rel (%p1407) target = $region36
        $region35: #{tpu_custom_call.1} parent=23 // pred_region
          %v1410 = vld [vmem:[#allocation2] sm:$0xff]
          %v1411 = vld [vmem:[#allocation2 + $0x8] sm:$0xff]
          %v1412 = vld [vmem:[#allocation2 + $0x10] sm:$0xff]
          %v1413 = vld [vmem:[#allocation2 + $0x18] sm:$0xff]
          %v1414 = vld [vmem:[#allocation2 + $0x20] sm:$0xff]
          %v1415 = vld [vmem:[#allocation2 + $0x28] sm:$0xff]
          %v1416 = vld [vmem:[#allocation2 + $0x30] sm:$0xff]
          %v1417 = vld [vmem:[#allocation2 + $0x38] sm:$0xff]
          %v1418 = vld [vmem:[#allocation2 + $0x40] sm:$0xff]
          %v1419 = vld [vmem:[#allocation2 + $0x48] sm:$0xff]
          %v1420 = vld [vmem:[#allocation2 + $0x50] sm:$0xff]
          %v1421 = vld [vmem:[#allocation2 + $0x58] sm:$0xff]
          %v1422 = vld [vmem:[#allocation2 + $0x60] sm:$0xff]
          %v1423 = vld [vmem:[#allocation2 + $0x68] sm:$0xff]
          %v1424 = vld [vmem:[#allocation2 + $0x70] sm:$0xff]
          %v1425 = vld [vmem:[#allocation2 + $0x78] sm:$0xff]
          %1426 = vxpose.xlu0.b32.start [1/16] %v1410, 128
          %1427 = vxpose.xlu0.b32.cont [2/16] %v1411, 128
          %1428 = vxpose.xlu0.b32.cont [3/16] %v1412, 128
          %1429 = vxpose.xlu0.b32.cont [4/16] %v1413, 128
          %1430 = vxpose.xlu0.b32.cont [5/16] %v1414, 128
          %1431 = vxpose.xlu0.b32.cont [6/16] %v1415, 128
          %1432 = vxpose.xlu0.b32.cont [7/16] %v1416, 128
          %1433 = vxpose.xlu0.b32.cont [8/16] %v1417, 128
          %1434 = vxpose.xlu0.b32.cont [9/16] %v1418, 128
          %1435 = vxpose.xlu0.b32.cont [10/16] %v1419, 128
          %1436 = vxpose.xlu0.b32.cont [11/16] %v1420, 128
          %1437 = vxpose.xlu0.b32.cont [12/16] %v1421, 128
          %1438 = vxpose.xlu0.b32.cont [13/16] %v1422, 128
          %1439 = vxpose.xlu0.b32.cont [14/16] %v1423, 128
          %1440 = vxpose.xlu0.b32.cont [15/16] %v1424, 128
          %1441 = vxpose.xlu0.b32.end [16/16] %v1425, 128
          %v1442 = vpop.trf.xlu0
          %v1443 = vpop.trf.xlu0
          %v1444 = vpop.trf.xlu0
          %v1445 = vpop.trf.xlu0
          %v1446 = vpop.trf.xlu0
          %v1447 = vpop.trf.xlu0
          %v1448 = vpop.trf.xlu0
          %v1449 = vpop.trf.xlu0
          %v1450 = vpop.trf.xlu0
          %v1451 = vpop.trf.xlu0
          %v1452 = vpop.trf.xlu0
          %v1453 = vpop.trf.xlu0
          %v1454 = vpop.trf.xlu0
          %v1455 = vpop.trf.xlu0
          %v1456 = vpop.trf.xlu0
          %v1457 = vpop.trf.xlu0
          %v1458 = vadd.f32 %v1410, %v1442
          %v1459 = vadd.f32 %v1411, %v1443
          %v1460 = vadd.f32 %v1412, %v1444
          %v1461 = vadd.f32 %v1413, %v1445
          %v1462 = vadd.f32 %v1414, %v1446
          %v1463 = vadd.f32 %v1415, %v1447
          %v1464 = vadd.f32 %v1416, %v1448
          %v1465 = vadd.f32 %v1417, %v1449
          %v1466 = vadd.f32 %v1418, %v1450
          %v1467 = vadd.f32 %v1419, %v1451
          %v1468 = vadd.f32 %v1420, %v1452
          %v1469 = vadd.f32 %v1421, %v1453
          %v1470 = vadd.f32 %v1422, %v1454
          %v1471 = vadd.f32 %v1423, %v1455
          %v1472 = vadd.f32 %v1424, %v1456
          %v1473 = vadd.f32 %v1425, %v1457
          %v1474 = vmul.f32 %v1458, 0.03125
          %v1475 = vmul.f32 %v1459, 0.03125
          %v1476 = vmul.f32 %v1460, 0.03125
          %v1477 = vmul.f32 %v1461, 0.03125
          %v1478 = vmul.f32 %v1462, 0.03125
          %v1479 = vmul.f32 %v1463, 0.03125
          %v1480 = vmul.f32 %v1464, 0.03125
          %v1481 = vmul.f32 %v1465, 0.03125
          %v1482 = vmul.f32 %v1466, 0.03125
          %v1483 = vmul.f32 %v1467, 0.03125
          %v1484 = vmul.f32 %v1468, 0.03125
          %v1485 = vmul.f32 %v1469, 0.03125
          %v1486 = vmul.f32 %v1470, 0.03125
          %v1487 = vmul.f32 %v1471, 0.03125
          %v1488 = vmul.f32 %v1472, 0.03125
          %v1489 = vmul.f32 %v1473, 0.03125
          %1490 = vst [vmem:[%s150] sm:$0xff] %v1474
          %1491 = vst [vmem:[%s150 + $0x8] sm:$0xff] %v1475
          %1492 = vst [vmem:[%s150 + $0x10] sm:$0xff] %v1476
          %1493 = vst [vmem:[%s150 + $0x18] sm:$0xff] %v1477
          %1494 = vst [vmem:[%s150 + $0x20] sm:$0xff] %v1478
          %1495 = vst [vmem:[%s150 + $0x28] sm:$0xff] %v1479
          %1496 = vst [vmem:[%s150 + $0x30] sm:$0xff] %v1480
          %1497 = vst [vmem:[%s150 + $0x38] sm:$0xff] %v1481
          %1498 = vst [vmem:[%s150 + $0x40] sm:$0xff] %v1482
          %1499 = vst [vmem:[%s150 + $0x48] sm:$0xff] %v1483
          %1500 = vst [vmem:[%s150 + $0x50] sm:$0xff] %v1484
          %1501 = vst [vmem:[%s150 + $0x58] sm:$0xff] %v1485
          %1502 = vst [vmem:[%s150 + $0x60] sm:$0xff] %v1486
          %1503 = vst [vmem:[%s150 + $0x68] sm:$0xff] %v1487
          %1504 = vst [vmem:[%s150 + $0x70] sm:$0xff] %v1488
          %1505 = vst [vmem:[%s150 + $0x78] sm:$0xff] %v1489
        $region36: #{tpu_custom_call.1} parent=23 // pred_fallthru
          _
        %s1506 = sand.u32 %s66, 1
        %s1507 = scalar_lea.sflag [#allocation6], %s1506
        %s1508 = sand.u32 %s66, 1
        %s1509 = smul.addr %s1508, 128
        %s1510 = scalar_lea.vmem [#allocation7], %s1509
        // Predicated region
        $region37: #{tpu_custom_call.1} parent=23 // pred_check
          %p1511 = pneg %p76
        $region38: #{tpu_custom_call.1} parent=23 // pred_check_branch
          %1513 = sbr.rel (%p1511) target = $region40
        $region39: #{tpu_custom_call.1} parent=23 // pred_region
          %s1515 = ssub.s32 2048, 2048
          %1516 = vsyncadd %s1507, %s1515
          %s1517 = smul.addr %s22, 16
          %s1518 = smul.addr %s1517, 128
          %s1519 = scalar_lea.hbm %s1, %s1518
          %s1520 = sshll.u32 %s1510, 4
          %s1521 = int_to_ptr.vmem [resolvable:$true] %s1520
          %1526 = dma.vmem_to_hbm [thread:$0]  %s1521, 2048, %s1519, %s1507, 128, 128, 8
        $region40: #{tpu_custom_call.1} parent=23 // pred_fallthru
          _
      $region24: #{tpu_custom_call.1} parent=5 // pred_fallthru
        _
      %p1527 = scmp.le.s32.totalorder 2, %s13
      // Predicated region
      $region41: #{tpu_custom_call.1} parent=5 // pred_check
        %p1528 = pneg %p1527
      $region42: #{tpu_custom_call.1} parent=5 // pred_check_branch
        %1530 = sbr.rel (%p1528) target = $region44
      $region43: #{tpu_custom_call.1} parent=5 // pred_region
        %s1531 = ssub.s32 %s13, 2
        // Predicated region
        $region45: #{tpu_custom_call.1} parent=43 // pred_check
          %p1532 = pneg %p82
        $region46: #{tpu_custom_call.1} parent=43 // pred_check_branch
          %1534 = sbr.rel (%p1532) target = $region48
        $region47: #{tpu_custom_call.1} parent=43 // pred_region
          %s1535 = sand.u32 %s67, 1
          %s1536 = scalar_lea.sflag [#allocation6], %s1535
          %s1537 = sand.u32 %s67, 1
          %s1538 = smul.addr %s1537, 128
          %s1539 = scalar_lea.vmem [#allocation7], %s1538
          %1540 = dma.done %s1536, 2048
        $region48: #{tpu_custom_call.1} parent=43 // pred_fallthru
          _
      $region44: #{tpu_custom_call.1} parent=5 // pred_fallthru
        _
    $region6: #{tpu_custom_call.1} parent=1 // loop_footer
      %s17 = sadd.s32 1, %s13
    $region7: #{tpu_custom_call.1} parent=1 // loop_footer_branch
      %12 = sbr.rel target = $region3
    $region8: #{tpu_custom_call.1} parent=1 // loop_exit
      _
    %1541 = vsyncpa [#allocation5], 1
    %s1542 = scalar_lea.sflag [#allocation5], 1
    %1543 = vsyncpa %s1542, 1
    %1544 = vsyncpa [#allocation6], 1
    %s1545 = scalar_lea.sflag [#allocation6], 1
    %1546 = vsyncpa %s1545, 1

</llo_original>
